<compile_context>
chip_gen: v7x
topology: tpu7x:2x2x1
jax: 0.10.0
libtpu: 0.0.40
codegen_flags: <defaults>
</compile_context>

<pallas_src>
import numpy as np
import jax
import jax.numpy as jnp
from jax.experimental import pallas as pl
from jax.experimental.pallas import tpu as pltpu


def _mm(a, b):                  # a @ b, f32 accumulation on the MXU
    return jax.lax.dot_general(a, b, (((1,), (0,)), ((), ())),
                               preferred_element_type=jnp.float32)


def _mmt(a, b):                 # a @ b.T
    return jax.lax.dot_general(a, b, (((1,), (1,)), ((), ())),
                               preferred_element_type=jnp.float32)


def _round_up(x, m):
    return ((x + m - 1) // m) * m


def _pick_bm(n):
    """Batch-tile size: a multiple of 8 dividing n, else the whole batch."""
    for bm in (512, 256, 128, 64, 32, 16, 8):
        if n % bm == 0:
            return bm
    return n


# ----------------------------------------------------------------------------
# Forward pass (two Pallas stages + a tiny XLA gather in between)
# ----------------------------------------------------------------------------
def delan_forward(q, qd, qdd, params):
    """DeepLagrangianNetwork.forward (inv_dyn path). Returns (tau_pred, None)."""
    q = jnp.asarray(q, jnp.float32)
    qd = jnp.asarray(qd, jnp.float32)
    qdd = jnp.asarray(qdd, jnp.float32)
    n, d = q.shape
    assert qd.shape == (n, d) and qdd.shape == (n, d) and d >= 2
    nLo = d * (d - 1) // 2

    # ---- host-side constants (batch-independent, all tiny) -----------------
    rows, cols = np.tril_indices(d, -1)          # row-major strict-lower order
    Rg = np.zeros((d, nLo), np.float32); Rg[rows, np.arange(nLo)] = 1.0
    Cg = np.zeros((d, nLo), np.float32); Cg[cols, np.arange(nLo)] = 1.0
    # scrambled flattened-mask fill of dL_dq:
    #   dest column f = i*nLo + p  <-  source column (f % d)*nLo + (f // d)
    PermS = np.zeros((d * nLo, d * nLo), np.float32)
    f = np.arange(d * nLo)
    PermS[(f % d) * nLo + (f // d), f] = 1.0
    # lane-group fold matrices for the final quadratic contraction
    Fd = np.zeros((d * d, d), np.float32)
    Fd[np.arange(d * d), np.arange(d * d) // d] = 1.0
    Fo = np.zeros((d * nLo, d), np.float32)
    Fo[np.arange(d * nLo), np.arange(d * nLo) // nLo] = 1.0

    # fused head weights (one MXU pass instead of three / two narrow ones)
    WH = jnp.concatenate([params['WLd'].T, params['WG'].T, params['WLo'].T], axis=1)
    bH = jnp.concatenate([params['bLd'], params['bG'], params['bLo']])[None, :]
    WJ = jnp.concatenate([params['WLd'].T, params['WLo'].T], axis=1)

    # packed stage-1 output layout (lane offsets)
    off_p, off_o = d, 2 * d
    off_dld = 2 * d + nLo
    off_s = off_dld + d * d
    out1_w = off_s + d * nLo
    out1_pad = _round_up(out1_w, 128)
    mix_w = d * d + d * nLo
    out2_pad = _round_up(d, 128)

    bm = _pick_bm(n)
    grid = (n // bm,)

    # ------------------------- stage 1: per-sample --------------------------
    def stage1_kernel(q_ref, qd_ref, qdd_ref, w1t_ref, b1_ref, w2t_ref, b2_ref,
                      wh_ref, bh_ref, wj_ref, rg_ref, cg_ref, perms_ref,
                      out_ref):
        f32 = jnp.float32
        qb = q_ref[...]; qdb = qd_ref[...]; qddb = qdd_ref[...]
        W1T = w1t_ref[...]; b1 = b1_ref[...]
        W2T = w2t_ref[...]; b2 = b2_ref[...]
        WHt = wh_ref[...]; bHt = bh_ref[...]
        WJt = wj_ref[...]
        Rgm = rg_ref[...]; Cgm = cg_ref[...]
        Perm = perms_ref[...]

        leaky = lambda x: jnp.where(x > 0, x, f32(0.01) * x)

        # MLP forward with fused Ld/G/Lo head
        h1 = leaky(_mm(qb, W1T) + b1)
        h2 = leaky(_mm(h1, W2T) + b2)
        heads = _mm(h2, WHt) + bHt                       # (bm, 2d+nLo)
        h3 = heads[:, 0:d]
        g = heads[:, d:2 * d]
        Lo = heads[:, 2 * d:2 * d + nLo]

        # softplus and sigmoid share one exp (single EUP pass)
        e3 = jnp.exp(-jnp.abs(h3))
        Ld = jnp.maximum(h3, 0.0) + jnp.log(1.0 + e3)
        sig3 = jnp.where(h3 > 0, f32(1.0), e3) / (1.0 + e3)

        # gradient masks (module uses -0.01 here, not +0.01)
        dRelu1 = jnp.where(h1 > 0, f32(1.0), f32(-0.01))
        dRelu2 = jnp.where(h2 > 0, f32(1.0), f32(-0.01))

        # analytic Jacobian chain, unrolled over the static q-dim (d is tiny,
        # batch-independent); every tensor stays (bm, .).
        dld_cols, dlo_cols = [], []
        dld_dt = jnp.zeros_like(h3)
        dlo_dt = jnp.zeros_like(Lo)
        for k in range(d):
            A1_k = dRelu1 * W1T[k:k + 1, :]              # (bm, W)  d h1 / d q_k
            A2_k = dRelu2 * _mm(A1_k, W2T)               # (bm, W)  d h2 / d q_k
            hj_k = _mm(A2_k, WJt)                        # fused dld/dlo head
            dld_k = sig3 * hj_k[:, 0:d]                  # (bm, d)   d ld / d q_k
            dlo_k = hj_k[:, d:d + nLo]                   # (bm, nLo) d lo / d q_k
            qk = qdb[:, k:k + 1]
            dld_dt = dld_dt + qk * dld_k
            dlo_dt = dlo_dt + qk * dlo_k
            dld_cols.append(dld_k)
            dlo_cols.append(dlo_k)
        Dld_cat = jnp.concatenate(dld_cols, axis=1)      # (bm, d*d)
        Dlo_cat = jnp.concatenate(dlo_cols, axis=1)      # (bm, d*nLo)

        # lower-triangular products without materialising L:
        #   X @ Rg -> X[:, rows[p]],  X @ Cg -> X[:, cols[p]]
        #   _mmt(Y, Rg) / _mmt(Y, Cg) -> scatter-add over rows / cols
        qd_r = _mm(qdb, Rgm)
        qdd_r = _mm(qddb, Rgm)
        w = Ld * qdb + _mmt(Lo * qd_r, Cgm)              # L^T qd
        u = Ld * qddb + _mmt(Lo * qdd_r, Cgm)            # L^T qdd
        v = dld_dt * qdb + _mmt(dlo_dt * qd_r, Cgm)      # dL_dt^T qd

        u_c = _mm(u, Cgm); v_c = _mm(v, Cgm); w_c = _mm(w, Cgm)
        Hqdd = Ld * u + _mmt(Lo * u_c, Rgm) + f32(1e-9) * qddb
        dHdt_qd = (Ld * v + _mmt(Lo * v_c, Rgm)
                   + dld_dt * w + _mmt(dlo_dt * w_c, Rgm))
        tau_lin = Hqdd + dHdt_qd + g                     # everything but quad

        P_qw = qdb * w                                   # (bm, d)
        O_qw = qd_r * w_c                                # (bm, nLo): qd[rows]*w[cols]
        S_cat = _mm(Dlo_cat, Perm)                       # scrambled dL_dq coeffs

        packed = jnp.concatenate([tau_lin, P_qw, O_qw, Dld_cat, S_cat], axis=1)
        pad = out_ref.shape[1] - out1_w
        if pad:
            packed = jnp.concatenate(
                [packed, jnp.zeros((packed.shape[0], pad), jnp.float32)], axis=1)
        out_ref[...] = packed                            # full 128-lane store

    const_map = lambda i: (0, 0)
    batch_map = lambda i: (i, 0)

    stage1_consts = [
        params['W1'].T, params['b1'][None, :],
        params['W2'].T, params['b2'][None, :],
        WH, bH, WJ,
        Rg, Cg, PermS,
    ]
    stage1_consts = [jnp.asarray(a, jnp.float32) for a in stage1_consts]

    out1 = pl.pallas_call(
        stage1_kernel,
        out_shape=jax.ShapeDtypeStruct((n, out1_pad), jnp.float32),
        grid=grid,
        in_specs=[pl.BlockSpec((bm, d), batch_map)] * 3
                 + [pl.BlockSpec(tuple(a.shape), const_map) for a in stage1_consts],
        out_specs=pl.BlockSpec((bm, out1_pad), batch_map),
        compiler_params=pltpu.CompilerParams(
            dimension_semantics=("parallel",),
            vmem_limit_bytes=32 * 1024 * 1024),
    )(q, qd, qdd, *stage1_consts)

    # ---- the only cross-sample piece: the module's (b*d+i) % n batch mixing.
    # Pure data movement on (n, d) / (n, nLo) tensors with compile-time indices,
    # done between the two kernels (no O(n^2) Mix matrix anywhere).
    P_all = out1[:, off_p:off_p + d]
    O_all = out1[:, off_o:off_o + nLo]
    idx = jnp.asarray(np.arange(n * d) % n, jnp.int32)
    Pmix = jnp.take(P_all, idx, axis=0).reshape(n, d * d)
    Omix = jnp.take(O_all, idx, axis=0).reshape(n, d * nLo)
    mixed = jnp.concatenate([Pmix, Omix], axis=1)        # (n, d*d + d*nLo)

    # ------------------- stage 2: quadratic term + tau ----------------------
    def stage2_kernel(s1_ref, mixed_ref, fd_ref, fo_ref, out_ref):
        s1 = s1_ref[...]
        tau_lin = s1[:, 0:d]
        Dld_cat = s1[:, off_dld:off_dld + d * d]
        S_cat = s1[:, off_s:off_s + d * nLo]
        mixedv = mixed_ref[...]
        Pmixv = mixedv[:, 0:d * d]
        Omixv = mixedv[:, d * d:d * d + d * nLo]
        # quad[b,i] = sum_m dld_dq[b,m,i] P[bb,m] + sum_p S[b,i*nLo+p] O[bb,p]
        quad = _mm(Dld_cat * Pmixv, fd_ref[...]) + _mm(S_cat * Omixv, fo_ref[...])
        tau = tau_lin - quad
        pad = out_ref.shape[1] - d
        if pad:
            tau = jnp.concatenate(
                [tau, jnp.zeros((tau.shape[0], pad), jnp.float32)], axis=1)
        out_ref[...] = tau                               # full 128-lane store

    out2 = pl.pallas_call(
        stage2_kernel,
        out_shape=jax.ShapeDtypeStruct((n, out2_pad), jnp.float32),
        grid=grid,
        in_specs=[pl.BlockSpec((bm, out1_pad), batch_map),
                  pl.BlockSpec((bm, mix_w), batch_map),
                  pl.BlockSpec((d * d, d), const_map),
                  pl.BlockSpec((d * nLo, d), const_map)],
        out_specs=pl.BlockSpec((bm, out2_pad), batch_map),
        compiler_params=pltpu.CompilerParams(
            dimension_semantics=("parallel",),
            vmem_limit_bytes=32 * 1024 * 1024),
    )(out1, mixed, jnp.asarray(Fd), jnp.asarray(Fo))

    tau_pred = out2[:, :d]
    return tau_pred, None


# ----------------------------------------------------------------------------
# Pure-JAX reference (faithful transcription of the PyTorch graph)
# ----------------------------------------------------------------------------
def reference(q, qd, qdd, p):
    n, d = q.shape
    nLo = d * (d - 1) // 2
    rows, cols = np.tril_indices(d, -1)
    leaky = lambda x: jnp.where(x > 0, x, 0.01 * x)
    softplus = lambda x: jnp.maximum(x, 0.0) + jnp.log(1.0 + jnp.exp(-jnp.abs(x)))

    h1 = leaky(q @ p['W1'].T + p['b1'])
    h2 = leaky(h1 @ p['W2'].T + p['b2'])
    h3 = h2 @ p['WLd'].T + p['bLd']
    g = h2 @ p['WG'].T + p['bG']
    Ld = softplus(h3)
    Lo = h2 @ p['WLo'].T + p['bLo']

    def assemble(lo, ld):
        L = jnp.zeros((n, d, d)).at[:, rows, cols].set(lo)
        return L + jnp.eye(d)[None] * ld[:, :, None]

    dRelu1 = jnp.where(h1 > 0, 1.0, -0.01)
    dRelu2 = jnp.where(h2 > 0, 1.0, -0.01)
    sig3 = 1.0 / (1.0 + jnp.exp(-h3))

    dh1_dq = dRelu1[:, :, None] * p['W1'][None]
    dh2_dh1 = dRelu2[:, :, None] * p['W2'][None]
    dld_dh2 = sig3[:, :, None] * p['WLd'][None]
    dld_dq = jnp.einsum('ndw,nwv,nvk->ndk', dld_dh2, dh2_dh1, dh1_dq)
    dlo_dq = jnp.einsum('mw,nwv,nvk->nmk', p['WLo'], dh2_dh1, dh1_dq)
    dld_dt = jnp.einsum('ndk,nk->nd', dld_dq, qd)
    dlo_dt = jnp.einsum('nmk,nk->nm', dlo_dq, qd)
    dld_dq_perm = jnp.transpose(dld_dq, (0, 2, 1))

    dL_dt = assemble(dlo_dt, dld_dt)
    L = assemble(Lo, Ld)

    # dL_dq with the PyTorch flattened boolean-mask fill semantics
    dlo_flat = dlo_dq.reshape(n, nLo * d)
    dL_dq = jnp.zeros((n, d, d, d))
    for i in range(d):
        vals = dlo_flat[:, i * nLo:(i + 1) * nLo]
        slab = jnp.zeros((n, d, d)).at[:, rows, cols].set(vals)
        slab = slab + jnp.eye(d)[None] * dld_dq_perm[:, i, :][:, :, None]
        dL_dq = dL_dq.at[:, i].set(slab)

    H = L @ jnp.transpose(L, (0, 2, 1)) + 1e-9 * jnp.eye(d)
    dH_dt = L @ jnp.transpose(dL_dt, (0, 2, 1)) + dL_dt @ jnp.transpose(L, (0, 2, 1))

    quad = jnp.zeros((n, d))
    for b in range(n):
        for i in range(d):
            k = b * d + i
            bb = k % n
            A = dL_dq[b, i]
            M = A @ L[bb].T + L[bb] @ A.T
            quad = quad.at[b, i].set(qd[bb] @ M @ qd[bb])

    c = jnp.einsum('nij,nj->ni', dH_dt, qd) - 0.5 * quad
    Hqdd = jnp.einsum('nij,nj->ni', H, qdd)
    return Hqdd + c + g


# ----------------------------------------------------------------------------
# main
# ----------------------------------------------------------------------------
def _init_linear(key, out_f, in_f):
    k1, k2 = jax.random.split(key)
    bound = 1.0 / np.sqrt(in_f)
    W = jax.random.uniform(k1, (out_f, in_f), jnp.float32, -bound, bound)
    b = jax.random.uniform(k2, (out_f,), jnp.float32, -bound, bound)
    return W, b


if __name__ == "__main__":
    q_dim, n_width, batch = 4, 32, 2
    num_Lo = q_dim * (q_dim - 1) // 2

    key = jax.random.PRNGKey(0)
    keys = jax.random.split(key, 8)
    params = {}
    params['W1'], params['b1'] = _init_linear(keys[0], n_width, q_dim)
    params['W2'], params['b2'] = _init_linear(keys[1], n_width, n_width)
    params['WG'], params['bG'] = _init_linear(keys[2], q_dim, n_width)
    params['WLd'], params['bLd'] = _init_linear(keys[3], q_dim, n_width)
    params['WLo'], params['bLo'] = _init_linear(keys[4], num_Lo, n_width)

    q = jax.random.normal(keys[5], (batch, q_dim), jnp.float32)
    qd = jax.random.normal(keys[6], (batch, q_dim), jnp.float32)
    qdd = jax.random.normal(keys[7], (batch, q_dim), jnp.float32)

    tau_pred, _ = delan_forward(q, qd, qdd, params)
    tau_pred = jax.block_until_ready(tau_pred)

    tau_ref = reference(q, qd, qdd, params)
    assert tau_pred.shape == (batch, q_dim)
    assert jnp.allclose(tau_pred, tau_ref, atol=1e-3, rtol=1e-3), (tau_pred, tau_ref)

    print("KERNEL_OK")
</pallas_src>

<mosaic_0001>
module attributes {stable_mosaic.version = 11 : i64} {
  func.func @stage1_kernel(%arg0: i32, %arg1: memref<2x4xf32, #tpu.memory_space<vmem>>, %arg2: memref<2x4xf32, #tpu.memory_space<vmem>>, %arg3: memref<2x4xf32, #tpu.memory_space<vmem>>, %arg4: memref<4x32xf32, #tpu.memory_space<vmem>>, %arg5: memref<1x32xf32, #tpu.memory_space<vmem>>, %arg6: memref<32x32xf32, #tpu.memory_space<vmem>>, %arg7: memref<1x32xf32, #tpu.memory_space<vmem>>, %arg8: memref<32x14xf32, #tpu.memory_space<vmem>>, %arg9: memref<1x14xf32, #tpu.memory_space<vmem>>, %arg10: memref<32x10xf32, #tpu.memory_space<vmem>>, %arg11: memref<4x6xf32, #tpu.memory_space<vmem>>, %arg12: memref<4x6xf32, #tpu.memory_space<vmem>>, %arg13: memref<24x24xf32, #tpu.memory_space<vmem>>, %arg14: memref<2x128xf32, #tpu.memory_space<vmem>>) attributes {dimension_semantics = [#tpu.dimension_semantics<parallel>], iteration_bounds = array<i64: 1>, scalar_prefetch = 0 : i64, scratch_operands = 0 : i64, tpu.core_type = #tpu.core_type<tc>, window_params = [{transform_indices = @transform_0, window_bounds = array<i64: 2, 4>}, {transform_indices = @transform_1, window_bounds = array<i64: 2, 4>}, {transform_indices = @transform_2, window_bounds = array<i64: 2, 4>}, {pipeline_mode = #tpu.pipeline_mode<synchronous>, transform_indices = @transform_3, window_bounds = array<i64: 4, 32>}, {pipeline_mode = #tpu.pipeline_mode<synchronous>, transform_indices = @transform_4, window_bounds = array<i64: 1, 32>}, {pipeline_mode = #tpu.pipeline_mode<synchronous>, transform_indices = @transform_5, window_bounds = array<i64: 32, 32>}, {pipeline_mode = #tpu.pipeline_mode<synchronous>, transform_indices = @transform_6, window_bounds = array<i64: 1, 32>}, {pipeline_mode = #tpu.pipeline_mode<synchronous>, transform_indices = @transform_7, window_bounds = array<i64: 32, 14>}, {pipeline_mode = #tpu.pipeline_mode<synchronous>, transform_indices = @transform_8, window_bounds = array<i64: 1, 14>}, {pipeline_mode = #tpu.pipeline_mode<synchronous>, transform_indices = @transform_9, window_bounds = array<i64: 32, 10>}, {pipeline_mode = #tpu.pipeline_mode<synchronous>, transform_indices = @transform_10, window_bounds = array<i64: 4, 6>}, {pipeline_mode = #tpu.pipeline_mode<synchronous>, transform_indices = @transform_11, window_bounds = array<i64: 4, 6>}, {pipeline_mode = #tpu.pipeline_mode<synchronous>, transform_indices = @transform_12, window_bounds = array<i64: 24, 24>}, {transform_indices = @transform_13, window_bounds = array<i64: 2, 128>}]} {
    %c0 = arith.constant 0 : index
    %c0_0 = arith.constant 0 : index
    %0 = vector.load %arg1[%c0, %c0_0] : memref<2x4xf32, #tpu.memory_space<vmem>>, vector<2x4xf32>
    %c0_1 = arith.constant 0 : index
    %c0_2 = arith.constant 0 : index
    %1 = vector.load %arg2[%c0_1, %c0_2] : memref<2x4xf32, #tpu.memory_space<vmem>>, vector<2x4xf32>
    %c0_3 = arith.constant 0 : index
    %c0_4 = arith.constant 0 : index
    %2 = vector.load %arg3[%c0_3, %c0_4] : memref<2x4xf32, #tpu.memory_space<vmem>>, vector<2x4xf32>
    %c0_5 = arith.constant 0 : index
    %c0_6 = arith.constant 0 : index
    %3 = vector.load %arg4[%c0_5, %c0_6] : memref<4x32xf32, #tpu.memory_space<vmem>>, vector<4x32xf32>
    %c0_7 = arith.constant 0 : index
    %c0_8 = arith.constant 0 : index
    %4 = vector.load %arg5[%c0_7, %c0_8] : memref<1x32xf32, #tpu.memory_space<vmem>>, vector<1x32xf32>
    %c0_9 = arith.constant 0 : index
    %c0_10 = arith.constant 0 : index
    %5 = vector.load %arg6[%c0_9, %c0_10] : memref<32x32xf32, #tpu.memory_space<vmem>>, vector<32x32xf32>
    %c0_11 = arith.constant 0 : index
    %c0_12 = arith.constant 0 : index
    %6 = vector.load %arg7[%c0_11, %c0_12] : memref<1x32xf32, #tpu.memory_space<vmem>>, vector<1x32xf32>
    %c0_13 = arith.constant 0 : index
    %c0_14 = arith.constant 0 : index
    %7 = vector.load %arg8[%c0_13, %c0_14] : memref<32x14xf32, #tpu.memory_space<vmem>>, vector<32x14xf32>
    %c0_15 = arith.constant 0 : index
    %c0_16 = arith.constant 0 : index
    %8 = vector.load %arg9[%c0_15, %c0_16] : memref<1x14xf32, #tpu.memory_space<vmem>>, vector<1x14xf32>
    %c0_17 = arith.constant 0 : index
    %c0_18 = arith.constant 0 : index
    %9 = vector.load %arg10[%c0_17, %c0_18] : memref<32x10xf32, #tpu.memory_space<vmem>>, vector<32x10xf32>
    %c0_19 = arith.constant 0 : index
    %c0_20 = arith.constant 0 : index
    %10 = vector.load %arg11[%c0_19, %c0_20] : memref<4x6xf32, #tpu.memory_space<vmem>>, vector<4x6xf32>
    %c0_21 = arith.constant 0 : index
    %c0_22 = arith.constant 0 : index
    %11 = vector.load %arg12[%c0_21, %c0_22] : memref<4x6xf32, #tpu.memory_space<vmem>>, vector<4x6xf32>
    %c0_23 = arith.constant 0 : index
    %c0_24 = arith.constant 0 : index
    %12 = vector.load %arg13[%c0_23, %c0_24] : memref<24x24xf32, #tpu.memory_space<vmem>>, vector<24x24xf32>
    %cst = arith.constant dense<0.000000e+00> : vector<2x32xf32>
    %13 = tpu.matmul %0, %3, %cst {dimension_numbers = #tpu.dot_dimension_numbers<[1], [0], [0], [1], [0, 0, 1, 1], [], []>} : vector<2x4xf32>, vector<4x32xf32>, vector<2x32xf32> -> vector<2x32xf32>
    %14 = vector.broadcast %4 : vector<1x32xf32> to vector<2x32xf32>
    %15 = arith.addf %13, %14 : vector<2x32xf32>
    %cst_25 = arith.constant 0.000000e+00 : f32
    %16 = vector.broadcast %cst_25 : f32 to vector<2x32xf32>
    %17 = arith.cmpf ogt, %15, %16 : vector<2x32xf32>
    %cst_26 = arith.constant 0.00999999977 : f32
    %18 = vector.broadcast %cst_26 : f32 to vector<2x32xf32>
    %19 = arith.mulf %18, %15 : vector<2x32xf32>
    %20 = arith.select %17, %15, %19 : vector<2x32xi1>, vector<2x32xf32>
    %cst_27 = arith.constant dense<0.000000e+00> : vector<2x32xf32>
    %21 = tpu.matmul %20, %5, %cst_27 {dimension_numbers = #tpu.dot_dimension_numbers<[1], [0], [0], [1], [0, 0, 1, 1], [], []>} : vector<2x32xf32>, vector<32x32xf32>, vector<2x32xf32> -> vector<2x32xf32>
    %22 = vector.broadcast %6 : vector<1x32xf32> to vector<2x32xf32>
    %23 = arith.addf %21, %22 : vector<2x32xf32>
    %cst_28 = arith.constant 0.000000e+00 : f32
    %24 = vector.broadcast %cst_28 : f32 to vector<2x32xf32>
    %25 = arith.cmpf ogt, %23, %24 : vector<2x32xf32>
    %cst_29 = arith.constant 0.00999999977 : f32
    %26 = vector.broadcast %cst_29 : f32 to vector<2x32xf32>
    %27 = arith.mulf %26, %23 : vector<2x32xf32>
    %28 = arith.select %25, %23, %27 : vector<2x32xi1>, vector<2x32xf32>
    %cst_30 = arith.constant dense<0.000000e+00> : vector<2x14xf32>
    %29 = tpu.matmul %28, %7, %cst_30 {dimension_numbers = #tpu.dot_dimension_numbers<[1], [0], [0], [1], [0, 0, 1, 1], [], []>} : vector<2x32xf32>, vector<32x14xf32>, vector<2x14xf32> -> vector<2x14xf32>
    %30 = vector.broadcast %8 : vector<1x14xf32> to vector<2x14xf32>
    %31 = arith.addf %29, %30 : vector<2x14xf32>
    %32 = vector.extract_strided_slice %31 {offsets = [0, 0], sizes = [2, 4], strides = [1, 1]} : vector<2x14xf32> to vector<2x4xf32>
    %33 = vector.extract_strided_slice %31 {offsets = [0, 4], sizes = [2, 4], strides = [1, 1]} : vector<2x14xf32> to vector<2x4xf32>
    %34 = vector.extract_strided_slice %31 {offsets = [0, 8], sizes = [2, 6], strides = [1, 1]} : vector<2x14xf32> to vector<2x6xf32>
    %35 = math.absf %32 : vector<2x4xf32>
    %cst_31 = arith.constant 0.000000e+00 : f32
    %36 = vector.broadcast %cst_31 : f32 to vector<2x4xf32>
    %37 = arith.subf %36, %35 : vector<2x4xf32>
    %38 = math.exp %37 : vector<2x4xf32>
    %cst_32 = arith.constant 0.000000e+00 : f32
    %39 = vector.broadcast %cst_32 : f32 to vector<2x4xf32>
    %40 = arith.maximumf %32, %39 : vector<2x4xf32>
    %cst_33 = arith.constant 1.000000e+00 : f32
    %41 = vector.broadcast %cst_33 : f32 to vector<2x4xf32>
    %42 = arith.addf %41, %38 : vector<2x4xf32>
    %43 = math.log %42 : vector<2x4xf32>
    %44 = arith.addf %40, %43 : vector<2x4xf32>
    %cst_34 = arith.constant 0.000000e+00 : f32
    %45 = vector.broadcast %cst_34 : f32 to vector<2x4xf32>
    %46 = arith.cmpf ogt, %32, %45 : vector<2x4xf32>
    %cst_35 = arith.constant 1.000000e+00 : f32
    %47 = vector.broadcast %cst_35 : f32 to vector<2x4xf32>
    %48 = arith.select %46, %47, %38 : vector<2x4xi1>, vector<2x4xf32>
    %cst_36 = arith.constant 1.000000e+00 : f32
    %49 = vector.broadcast %cst_36 : f32 to vector<2x4xf32>
    %50 = arith.addf %49, %38 : vector<2x4xf32>
    %51 = arith.divf %48, %50 : vector<2x4xf32>
    %cst_37 = arith.constant 0.000000e+00 : f32
    %52 = vector.broadcast %cst_37 : f32 to vector<2x32xf32>
    %53 = arith.cmpf ogt, %20, %52 : vector<2x32xf32>
    %cst_38 = arith.constant 1.000000e+00 : f32
    %cst_39 = arith.constant -0.00999999977 : f32
    %54 = vector.broadcast %cst_38 : f32 to vector<2x32xf32>
    %55 = vector.broadcast %cst_39 : f32 to vector<2x32xf32>
    %56 = arith.select %53, %54, %55 : vector<2x32xi1>, vector<2x32xf32>
    %cst_40 = arith.constant 0.000000e+00 : f32
    %57 = vector.broadcast %cst_40 : f32 to vector<2x32xf32>
    %58 = arith.cmpf ogt, %28, %57 : vector<2x32xf32>
    %cst_41 = arith.constant 1.000000e+00 : f32
    %cst_42 = arith.constant -0.00999999977 : f32
    %59 = vector.broadcast %cst_41 : f32 to vector<2x32xf32>
    %60 = vector.broadcast %cst_42 : f32 to vector<2x32xf32>
    %61 = arith.select %58, %59, %60 : vector<2x32xi1>, vector<2x32xf32>
    %cst_43 = arith.constant 0.000000e+00 : f32
    %62 = vector.broadcast %cst_43 : f32 to vector<2x4xf32>
    %cst_44 = arith.constant 0.000000e+00 : f32
    %63 = vector.broadcast %cst_44 : f32 to vector<2x6xf32>
    %64 = vector.extract_strided_slice %3 {offsets = [0, 0], sizes = [1, 32], strides = [1, 1]} : vector<4x32xf32> to vector<1x32xf32>
    %65 = vector.broadcast %64 : vector<1x32xf32> to vector<2x32xf32>
    %66 = arith.mulf %56, %65 : vector<2x32xf32>
    %cst_45 = arith.constant dense<0.000000e+00> : vector<2x32xf32>
    %67 = tpu.matmul %66, %5, %cst_45 {dimension_numbers = #tpu.dot_dimension_numbers<[1], [0], [0], [1], [0, 0, 1, 1], [], []>} : vector<2x32xf32>, vector<32x32xf32>, vector<2x32xf32> -> vector<2x32xf32>
    %68 = arith.mulf %61, %67 : vector<2x32xf32>
    %cst_46 = arith.constant dense<0.000000e+00> : vector<2x10xf32>
    %69 = tpu.matmul %68, %9, %cst_46 {dimension_numbers = #tpu.dot_dimension_numbers<[1], [0], [0], [1], [0, 0, 1, 1], [], []>} : vector<2x32xf32>, vector<32x10xf32>, vector<2x10xf32> -> vector<2x10xf32>
    %70 = vector.extract_strided_slice %69 {offsets = [0, 0], sizes = [2, 4], strides = [1, 1]} : vector<2x10xf32> to vector<2x4xf32>
    %71 = arith.mulf %51, %70 : vector<2x4xf32>
    %72 = vector.extract_strided_slice %69 {offsets = [0, 4], sizes = [2, 6], strides = [1, 1]} : vector<2x10xf32> to vector<2x6xf32>
    %73 = vector.extract_strided_slice %1 {offsets = [0, 0], sizes = [2, 1], strides = [1, 1]} : vector<2x4xf32> to vector<2x1xf32>
    %74 = vector.broadcast %73 : vector<2x1xf32> to vector<2x4xf32>
    %75 = arith.mulf %74, %71 : vector<2x4xf32>
    %76 = arith.addf %62, %75 : vector<2x4xf32>
    %77 = vector.broadcast %73 : vector<2x1xf32> to vector<2x6xf32>
    %78 = arith.mulf %77, %72 : vector<2x6xf32>
    %79 = arith.addf %63, %78 : vector<2x6xf32>
    %80 = vector.extract_strided_slice %3 {offsets = [1, 0], sizes = [1, 32], strides = [1, 1]} : vector<4x32xf32> to vector<1x32xf32>
    %81 = vector.broadcast %80 : vector<1x32xf32> to vector<2x32xf32>
    %82 = arith.mulf %56, %81 : vector<2x32xf32>
    %cst_47 = arith.constant dense<0.000000e+00> : vector<2x32xf32>
    %83 = tpu.matmul %82, %5, %cst_47 {dimension_numbers = #tpu.dot_dimension_numbers<[1], [0], [0], [1], [0, 0, 1, 1], [], []>} : vector<2x32xf32>, vector<32x32xf32>, vector<2x32xf32> -> vector<2x32xf32>
    %84 = arith.mulf %61, %83 : vector<2x32xf32>
    %cst_48 = arith.constant dense<0.000000e+00> : vector<2x10xf32>
    %85 = tpu.matmul %84, %9, %cst_48 {dimension_numbers = #tpu.dot_dimension_numbers<[1], [0], [0], [1], [0, 0, 1, 1], [], []>} : vector<2x32xf32>, vector<32x10xf32>, vector<2x10xf32> -> vector<2x10xf32>
    %86 = vector.extract_strided_slice %85 {offsets = [0, 0], sizes = [2, 4], strides = [1, 1]} : vector<2x10xf32> to vector<2x4xf32>
    %87 = arith.mulf %51, %86 : vector<2x4xf32>
    %88 = vector.extract_strided_slice %85 {offsets = [0, 4], sizes = [2, 6], strides = [1, 1]} : vector<2x10xf32> to vector<2x6xf32>
    %89 = vector.extract_strided_slice %1 {offsets = [0, 1], sizes = [2, 1], strides = [1, 1]} : vector<2x4xf32> to vector<2x1xf32>
    %90 = vector.broadcast %89 : vector<2x1xf32> to vector<2x4xf32>
    %91 = arith.mulf %90, %87 : vector<2x4xf32>
    %92 = arith.addf %76, %91 : vector<2x4xf32>
    %93 = vector.broadcast %89 : vector<2x1xf32> to vector<2x6xf32>
    %94 = arith.mulf %93, %88 : vector<2x6xf32>
    %95 = arith.addf %79, %94 : vector<2x6xf32>
    %96 = vector.extract_strided_slice %3 {offsets = [2, 0], sizes = [1, 32], strides = [1, 1]} : vector<4x32xf32> to vector<1x32xf32>
    %97 = vector.broadcast %96 : vector<1x32xf32> to vector<2x32xf32>
    %98 = arith.mulf %56, %97 : vector<2x32xf32>
    %cst_49 = arith.constant dense<0.000000e+00> : vector<2x32xf32>
    %99 = tpu.matmul %98, %5, %cst_49 {dimension_numbers = #tpu.dot_dimension_numbers<[1], [0], [0], [1], [0, 0, 1, 1], [], []>} : vector<2x32xf32>, vector<32x32xf32>, vector<2x32xf32> -> vector<2x32xf32>
    %100 = arith.mulf %61, %99 : vector<2x32xf32>
    %cst_50 = arith.constant dense<0.000000e+00> : vector<2x10xf32>
    %101 = tpu.matmul %100, %9, %cst_50 {dimension_numbers = #tpu.dot_dimension_numbers<[1], [0], [0], [1], [0, 0, 1, 1], [], []>} : vector<2x32xf32>, vector<32x10xf32>, vector<2x10xf32> -> vector<2x10xf32>
    %102 = vector.extract_strided_slice %101 {offsets = [0, 0], sizes = [2, 4], strides = [1, 1]} : vector<2x10xf32> to vector<2x4xf32>
    %103 = arith.mulf %51, %102 : vector<2x4xf32>
    %104 = vector.extract_strided_slice %101 {offsets = [0, 4], sizes = [2, 6], strides = [1, 1]} : vector<2x10xf32> to vector<2x6xf32>
    %105 = vector.extract_strided_slice %1 {offsets = [0, 2], sizes = [2, 1], strides = [1, 1]} : vector<2x4xf32> to vector<2x1xf32>
    %106 = vector.broadcast %105 : vector<2x1xf32> to vector<2x4xf32>
    %107 = arith.mulf %106, %103 : vector<2x4xf32>
    %108 = arith.addf %92, %107 : vector<2x4xf32>
    %109 = vector.broadcast %105 : vector<2x1xf32> to vector<2x6xf32>
    %110 = arith.mulf %109, %104 : vector<2x6xf32>
    %111 = arith.addf %95, %110 : vector<2x6xf32>
    %112 = vector.extract_strided_slice %3 {offsets = [3, 0], sizes = [1, 32], strides = [1, 1]} : vector<4x32xf32> to vector<1x32xf32>
    %113 = vector.broadcast %112 : vector<1x32xf32> to vector<2x32xf32>
    %114 = arith.mulf %56, %113 : vector<2x32xf32>
    %cst_51 = arith.constant dense<0.000000e+00> : vector<2x32xf32>
    %115 = tpu.matmul %114, %5, %cst_51 {dimension_numbers = #tpu.dot_dimension_numbers<[1], [0], [0], [1], [0, 0, 1, 1], [], []>} : vector<2x32xf32>, vector<32x32xf32>, vector<2x32xf32> -> vector<2x32xf32>
    %116 = arith.mulf %61, %115 : vector<2x32xf32>
    %cst_52 = arith.constant dense<0.000000e+00> : vector<2x10xf32>
    %117 = tpu.matmul %116, %9, %cst_52 {dimension_numbers = #tpu.dot_dimension_numbers<[1], [0], [0], [1], [0, 0, 1, 1], [], []>} : vector<2x32xf32>, vector<32x10xf32>, vector<2x10xf32> -> vector<2x10xf32>
    %118 = vector.extract_strided_slice %117 {offsets = [0, 0], sizes = [2, 4], strides = [1, 1]} : vector<2x10xf32> to vector<2x4xf32>
    %119 = arith.mulf %51, %118 : vector<2x4xf32>
    %120 = vector.extract_strided_slice %117 {offsets = [0, 4], sizes = [2, 6], strides = [1, 1]} : vector<2x10xf32> to vector<2x6xf32>
    %121 = vector.extract_strided_slice %1 {offsets = [0, 3], sizes = [2, 1], strides = [1, 1]} : vector<2x4xf32> to vector<2x1xf32>
    %122 = vector.broadcast %121 : vector<2x1xf32> to vector<2x4xf32>
    %123 = arith.mulf %122, %119 : vector<2x4xf32>
    %124 = arith.addf %108, %123 : vector<2x4xf32>
    %125 = vector.broadcast %121 : vector<2x1xf32> to vector<2x6xf32>
    %126 = arith.mulf %125, %120 : vector<2x6xf32>
    %127 = arith.addf %111, %126 : vector<2x6xf32>
    %128 = tpu.concatenate %71, %87, %103, %119 in 1 : vector<2x4xf32>, vector<2x4xf32>, vector<2x4xf32>, vector<2x4xf32> -> vector<2x16xf32>
    %129 = tpu.concatenate %72, %88, %104, %120 in 1 : vector<2x6xf32>, vector<2x6xf32>, vector<2x6xf32>, vector<2x6xf32> -> vector<2x24xf32>
    %cst_53 = arith.constant dense<0.000000e+00> : vector<2x6xf32>
    %130 = tpu.matmul %1, %10, %cst_53 {dimension_numbers = #tpu.dot_dimension_numbers<[1], [0], [0], [1], [0, 0, 1, 1], [], []>} : vector<2x4xf32>, vector<4x6xf32>, vector<2x6xf32> -> vector<2x6xf32>
    %cst_54 = arith.constant dense<0.000000e+00> : vector<2x6xf32>
    %131 = tpu.matmul %2, %10, %cst_54 {dimension_numbers = #tpu.dot_dimension_numbers<[1], [0], [0], [1], [0, 0, 1, 1], [], []>} : vector<2x4xf32>, vector<4x6xf32>, vector<2x6xf32> -> vector<2x6xf32>
    %132 = arith.mulf %44, %1 : vector<2x4xf32>
    %133 = arith.mulf %34, %130 : vector<2x6xf32>
    %cst_55 = arith.constant dense<0.000000e+00> : vector<2x4xf32>
    %134 = tpu.matmul %133, %11, %cst_55 {dimension_numbers = #tpu.dot_dimension_numbers<[1], [1], [0], [0], [0, 0, 1, 0], [], []>} : vector<2x6xf32>, vector<4x6xf32>, vector<2x4xf32> -> vector<2x4xf32>
    %135 = arith.addf %132, %134 : vector<2x4xf32>
    %136 = arith.mulf %44, %2 : vector<2x4xf32>
    %137 = arith.mulf %34, %131 : vector<2x6xf32>
    %cst_56 = arith.constant dense<0.000000e+00> : vector<2x4xf32>
    %138 = tpu.matmul %137, %11, %cst_56 {dimension_numbers = #tpu.dot_dimension_numbers<[1], [1], [0], [0], [0, 0, 1, 0], [], []>} : vector<2x6xf32>, vector<4x6xf32>, vector<2x4xf32> -> vector<2x4xf32>
    %139 = arith.addf %136, %138 : vector<2x4xf32>
    %140 = arith.mulf %124, %1 : vector<2x4xf32>
    %141 = arith.mulf %127, %130 : vector<2x6xf32>
    %cst_57 = arith.constant dense<0.000000e+00> : vector<2x4xf32>
    %142 = tpu.matmul %141, %11, %cst_57 {dimension_numbers = #tpu.dot_dimension_numbers<[1], [1], [0], [0], [0, 0, 1, 0], [], []>} : vector<2x6xf32>, vector<4x6xf32>, vector<2x4xf32> -> vector<2x4xf32>
    %143 = arith.addf %140, %142 : vector<2x4xf32>
    %cst_58 = arith.constant dense<0.000000e+00> : vector<2x6xf32>
    %144 = tpu.matmul %139, %11, %cst_58 {dimension_numbers = #tpu.dot_dimension_numbers<[1], [0], [0], [1], [0, 0, 1, 1], [], []>} : vector<2x4xf32>, vector<4x6xf32>, vector<2x6xf32> -> vector<2x6xf32>
    %cst_59 = arith.constant dense<0.000000e+00> : vector<2x6xf32>
    %145 = tpu.matmul %143, %11, %cst_59 {dimension_numbers = #tpu.dot_dimension_numbers<[1], [0], [0], [1], [0, 0, 1, 1], [], []>} : vector<2x4xf32>, vector<4x6xf32>, vector<2x6xf32> -> vector<2x6xf32>
    %cst_60 = arith.constant dense<0.000000e+00> : vector<2x6xf32>
    %146 = tpu.matmul %135, %11, %cst_60 {dimension_numbers = #tpu.dot_dimension_numbers<[1], [0], [0], [1], [0, 0, 1, 1], [], []>} : vector<2x4xf32>, vector<4x6xf32>, vector<2x6xf32> -> vector<2x6xf32>
    %147 = arith.mulf %44, %139 : vector<2x4xf32>
    %148 = arith.mulf %34, %144 : vector<2x6xf32>
    %cst_61 = arith.constant dense<0.000000e+00> : vector<2x4xf32>
    %149 = tpu.matmul %148, %10, %cst_61 {dimension_numbers = #tpu.dot_dimension_numbers<[1], [1], [0], [0], [0, 0, 1, 0], [], []>} : vector<2x6xf32>, vector<4x6xf32>, vector<2x4xf32> -> vector<2x4xf32>
    %150 = arith.addf %147, %149 : vector<2x4xf32>
    %cst_62 = arith.constant 9.99999971E-10 : f32
    %151 = vector.broadcast %cst_62 : f32 to vector<2x4xf32>
    %152 = arith.mulf %151, %2 : vector<2x4xf32>
    %153 = arith.addf %150, %152 : vector<2x4xf32>
    %154 = arith.mulf %44, %143 : vector<2x4xf32>
    %155 = arith.mulf %34, %145 : vector<2x6xf32>
    %cst_63 = arith.constant dense<0.000000e+00> : vector<2x4xf32>
    %156 = tpu.matmul %155, %10, %cst_63 {dimension_numbers = #tpu.dot_dimension_numbers<[1], [1], [0], [0], [0, 0, 1, 0], [], []>} : vector<2x6xf32>, vector<4x6xf32>, vector<2x4xf32> -> vector<2x4xf32>
    %157 = arith.addf %154, %156 : vector<2x4xf32>
    %158 = arith.mulf %124, %135 : vector<2x4xf32>
    %159 = arith.addf %157, %158 : vector<2x4xf32>
    %160 = arith.mulf %127, %146 : vector<2x6xf32>
    %cst_64 = arith.constant dense<0.000000e+00> : vector<2x4xf32>
    %161 = tpu.matmul %160, %10, %cst_64 {dimension_numbers = #tpu.dot_dimension_numbers<[1], [1], [0], [0], [0, 0, 1, 0], [], []>} : vector<2x6xf32>, vector<4x6xf32>, vector<2x4xf32> -> vector<2x4xf32>
    %162 = arith.addf %159, %161 : vector<2x4xf32>
    %163 = arith.addf %153, %162 : vector<2x4xf32>
    %164 = arith.addf %163, %33 : vector<2x4xf32>
    %165 = arith.mulf %1, %135 : vector<2x4xf32>
    %166 = arith.mulf %130, %146 : vector<2x6xf32>
    %cst_65 = arith.constant dense<0.000000e+00> : vector<2x24xf32>
    %167 = tpu.matmul %129, %12, %cst_65 {dimension_numbers = #tpu.dot_dimension_numbers<[1], [0], [0], [1], [0, 0, 1, 1], [], []>} : vector<2x24xf32>, vector<24x24xf32>, vector<2x24xf32> -> vector<2x24xf32>
    %168 = tpu.concatenate %164, %165, %166, %128, %167 in 1 : vector<2x4xf32>, vector<2x4xf32>, vector<2x6xf32>, vector<2x16xf32>, vector<2x24xf32> -> vector<2x54xf32>
    %cst_66 = arith.constant 0.000000e+00 : f32
    %169 = vector.broadcast %cst_66 : f32 to vector<2x74xf32>
    %170 = tpu.concatenate %168, %169 in 1 : vector<2x54xf32>, vector<2x74xf32> -> vector<2x128xf32>
    %c0_67 = arith.constant 0 : index
    %c0_68 = arith.constant 0 : index
    %171 = vector.load %arg14[%c0_67, %c0_68] : memref<2x128xf32, #tpu.memory_space<vmem>>, vector<2x128xf32>
    tpu.vector_store %arg14[%c0_67, %c0_68], %170 {strides = array<i32>} : memref<2x128xf32, #tpu.memory_space<vmem>>, vector<2x128xf32>,
    return
  }
  func.func @transform_0(%arg0: i32) -> (i32, i32) {
    %c0_i32 = arith.constant 0 : i32
    %c0_i32_0 = arith.constant 0 : i32
    return %arg0, %c0_i32 : i32, i32
  }
  func.func @transform_1(%arg0: i32) -> (i32, i32) {
    %c0_i32 = arith.constant 0 : i32
    %c0_i32_0 = arith.constant 0 : i32
    return %arg0, %c0_i32 : i32, i32
  }
  func.func @transform_2(%arg0: i32) -> (i32, i32) {
    %c0_i32 = arith.constant 0 : i32
    %c0_i32_0 = arith.constant 0 : i32
    return %arg0, %c0_i32 : i32, i32
  }
  func.func @transform_3(%arg0: i32) -> (i32, i32) {
    %c0_i32 = arith.constant 0 : i32
    %c0_i32_0 = arith.constant 0 : i32
    %c0_i32_1 = arith.constant 0 : i32
    return %c0_i32, %c0_i32_0 : i32, i32
  }
  func.func @transform_4(%arg0: i32) -> (i32, i32) {
    %c0_i32 = arith.constant 0 : i32
    %c0_i32_0 = arith.constant 0 : i32
    %c0_i32_1 = arith.constant 0 : i32
    return %c0_i32, %c0_i32_0 : i32, i32
  }
  func.func @transform_5(%arg0: i32) -> (i32, i32) {
    %c0_i32 = arith.constant 0 : i32
    %c0_i32_0 = arith.constant 0 : i32
    %c0_i32_1 = arith.constant 0 : i32
    return %c0_i32, %c0_i32_0 : i32, i32
  }
  func.func @transform_6(%arg0: i32) -> (i32, i32) {
    %c0_i32 = arith.constant 0 : i32
    %c0_i32_0 = arith.constant 0 : i32
    %c0_i32_1 = arith.constant 0 : i32
    return %c0_i32, %c0_i32_0 : i32, i32
  }
  func.func @transform_7(%arg0: i32) -> (i32, i32) {
    %c0_i32 = arith.constant 0 : i32
    %c0_i32_0 = arith.constant 0 : i32
    %c0_i32_1 = arith.constant 0 : i32
    return %c0_i32, %c0_i32_0 : i32, i32
  }
  func.func @transform_8(%arg0: i32) -> (i32, i32) {
    %c0_i32 = arith.constant 0 : i32
    %c0_i32_0 = arith.constant 0 : i32
    %c0_i32_1 = arith.constant 0 : i32
    return %c0_i32, %c0_i32_0 : i32, i32
  }
  func.func @transform_9(%arg0: i32) -> (i32, i32) {
    %c0_i32 = arith.constant 0 : i32
    %c0_i32_0 = arith.constant 0 : i32
    %c0_i32_1 = arith.constant 0 : i32
    return %c0_i32, %c0_i32_0 : i32, i32
  }
  func.func @transform_10(%arg0: i32) -> (i32, i32) {
    %c0_i32 = arith.constant 0 : i32
    %c0_i32_0 = arith.constant 0 : i32
    %c0_i32_1 = arith.constant 0 : i32
    return %c0_i32, %c0_i32_0 : i32, i32
  }
  func.func @transform_11(%arg0: i32) -> (i32, i32) {
    %c0_i32 = arith.constant 0 : i32
    %c0_i32_0 = arith.constant 0 : i32
    %c0_i32_1 = arith.constant 0 : i32
    return %c0_i32, %c0_i32_0 : i32, i32
  }
  func.func @transform_12(%arg0: i32) -> (i32, i32) {
    %c0_i32 = arith.constant 0 : i32
    %c0_i32_0 = arith.constant 0 : i32
    %c0_i32_1 = arith.constant 0 : i32
    return %c0_i32, %c0_i32_0 : i32, i32
  }
  func.func @transform_13(%arg0: i32) -> (i32, i32) {
    %c0_i32 = arith.constant 0 : i32
    %c0_i32_0 = arith.constant 0 : i32
    return %arg0, %c0_i32 : i32, i32
  }
}

</mosaic_0001>

<llo_original>
// kernel: tpu_custom_call.1
$region0: #{tpu_custom_call.1}
  #allocation0 [shape = 'u32[]', space=smem, size = 0x4, offset = 0x4, fixed_abs, tag = 'smem constant byte address 0x4 - core index']
  #allocation1 [shape = 'u32[144,128]{1,0:T(1,128)}', space=vmem, size = 0x12000, scoped, tag = 'internal scratch']
  %s0 = inlined_call_operand.vmem [shape: f32[2,4], index: 0, kind: input, shape index: {}]
  %s1 = inlined_call_operand.vmem [shape: f32[2,4], index: 1, kind: input, shape index: {}]
  %s2 = inlined_call_operand.vmem [shape: f32[2,4], index: 2, kind: input, shape index: {}]
  %s3 = inlined_call_operand.vmem [shape: f32[4,32], index: 3, kind: input, shape index: {}]
  %s4 = inlined_call_operand.vmem [shape: f32[1,32], index: 4, kind: input, shape index: {}]
  %s5 = inlined_call_operand.vmem [shape: f32[32,32], index: 5, kind: input, shape index: {}]
  %s6 = inlined_call_operand.vmem [shape: f32[1,32], index: 6, kind: input, shape index: {}]
  %s7 = inlined_call_operand.vmem [shape: f32[32,14], index: 7, kind: input, shape index: {}]
  %s8 = inlined_call_operand.vmem [shape: f32[1,14], index: 8, kind: input, shape index: {}]
  %s9 = inlined_call_operand.vmem [shape: f32[32,10], index: 9, kind: input, shape index: {}]
  %s10 = inlined_call_operand.vmem [shape: f32[4,6], index: 10, kind: input, shape index: {}]
  %s11 = inlined_call_operand.vmem [shape: f32[4,6], index: 11, kind: input, shape index: {}]
  %s12 = inlined_call_operand.vmem [shape: f32[24,24], index: 12, kind: input, shape index: {}]
  %s13 = inlined_call_operand.hbm [shape: f32[2,128], index: 13, kind: output, shape index: {}]
  %s14 = sld [smem:[#allocation0]]
  $region62: #{tpu_custom_call.1} parent=0
    _
  %s16 = ssub.s32 1, %s14
  %s17 = scalar_select 0, %s16, %s14
  $region1: #{tpu_custom_call.1} parent=0
    #allocation2 [shape = 'u8[1024]{0}', space=vmem, size = 0x400, scoped, tag = 'output window, operand 0, single buffered']
    #allocation3 [shape = 's32[1]{0}', space=sflag, size = 0x4, scoped, tag = 'scoped memory for tpu_custom_call.1']
    %18 = vsyncpa [#allocation3], 0
    // Predicated region
    $region2: #{tpu_custom_call.1} parent=1 // pred_check
      _
    $region3: #{tpu_custom_call.1} parent=1 // pred_check_branch
      %20 = sbr.rel (0) target = $region5
    $region4: #{tpu_custom_call.1} parent=1 // pred_region
      _
    $region5: #{tpu_custom_call.1} parent=1 // pred_fallthru
      _
    // Predicated region
    $region6: #{tpu_custom_call.1} parent=1 // pred_check
      _
    $region7: #{tpu_custom_call.1} parent=1 // pred_check_branch
      %22 = sbr.rel (0) target = $region9
    $region8: #{tpu_custom_call.1} parent=1 // pred_region
      _
    $region9: #{tpu_custom_call.1} parent=1 // pred_fallthru
      _
    // Predicated region
    $region10: #{tpu_custom_call.1} parent=1 // pred_check
      _
    $region11: #{tpu_custom_call.1} parent=1 // pred_check_branch
      %24 = sbr.rel (0) target = $region13
    $region12: #{tpu_custom_call.1} parent=1 // pred_region
      _
    $region13: #{tpu_custom_call.1} parent=1 // pred_fallthru
      _
    // Predicated region
    $region14: #{tpu_custom_call.1} parent=1 // pred_check
      _
    $region15: #{tpu_custom_call.1} parent=1 // pred_check_branch
      %26 = sbr.rel (0) target = $region17
    $region16: #{tpu_custom_call.1} parent=1 // pred_region
      _
    $region17: #{tpu_custom_call.1} parent=1 // pred_fallthru
      _
    // Predicated region
    $region18: #{tpu_custom_call.1} parent=1 // pred_check
      _
    $region19: #{tpu_custom_call.1} parent=1 // pred_check_branch
      %28 = sbr.rel (0) target = $region21
    $region20: #{tpu_custom_call.1} parent=1 // pred_region
      _
    $region21: #{tpu_custom_call.1} parent=1 // pred_fallthru
      _
    // Predicated region
    $region22: #{tpu_custom_call.1} parent=1 // pred_check
      _
    $region23: #{tpu_custom_call.1} parent=1 // pred_check_branch
      %30 = sbr.rel (0) target = $region25
    $region24: #{tpu_custom_call.1} parent=1 // pred_region
      _
    $region25: #{tpu_custom_call.1} parent=1 // pred_fallthru
      _
    // Predicated region
    $region26: #{tpu_custom_call.1} parent=1 // pred_check
      _
    $region27: #{tpu_custom_call.1} parent=1 // pred_check_branch
      %32 = sbr.rel (0) target = $region29
    $region28: #{tpu_custom_call.1} parent=1 // pred_region
      _
    $region29: #{tpu_custom_call.1} parent=1 // pred_fallthru
      _
    // Predicated region
    $region30: #{tpu_custom_call.1} parent=1 // pred_check
      _
    $region31: #{tpu_custom_call.1} parent=1 // pred_check_branch
      %34 = sbr.rel (0) target = $region33
    $region32: #{tpu_custom_call.1} parent=1 // pred_region
      _
    $region33: #{tpu_custom_call.1} parent=1 // pred_fallthru
      _
    // Predicated region
    $region34: #{tpu_custom_call.1} parent=1 // pred_check
      _
    $region35: #{tpu_custom_call.1} parent=1 // pred_check_branch
      %36 = sbr.rel (0) target = $region37
    $region36: #{tpu_custom_call.1} parent=1 // pred_region
      _
    $region37: #{tpu_custom_call.1} parent=1 // pred_fallthru
      _
    // Predicated region
    $region38: #{tpu_custom_call.1} parent=1 // pred_check
      _
    $region39: #{tpu_custom_call.1} parent=1 // pred_check_branch
      %38 = sbr.rel (0) target = $region41
    $region40: #{tpu_custom_call.1} parent=1 // pred_region
      _
    $region41: #{tpu_custom_call.1} parent=1 // pred_fallthru
      _
    // Predicated region
    $region42: #{tpu_custom_call.1} parent=1 // pred_check
      _
    $region43: #{tpu_custom_call.1} parent=1 // pred_check_branch
      %40 = sbr.rel (0) target = $region45
    $region44: #{tpu_custom_call.1} parent=1 // pred_region
      _
    $region45: #{tpu_custom_call.1} parent=1 // pred_fallthru
      _
    // Predicated region
    $region46: #{tpu_custom_call.1} parent=1 // pred_check
      _
    $region47: #{tpu_custom_call.1} parent=1 // pred_check_branch
      %42 = sbr.rel (0) target = $region49
    $region48: #{tpu_custom_call.1} parent=1 // pred_region
      _
    $region49: #{tpu_custom_call.1} parent=1 // pred_fallthru
      _
    // Predicated region
    $region50: #{tpu_custom_call.1} parent=1 // pred_check
      _
    $region51: #{tpu_custom_call.1} parent=1 // pred_check_branch
      %44 = sbr.rel (0) target = $region53
    $region52: #{tpu_custom_call.1} parent=1 // pred_region
      _
    $region53: #{tpu_custom_call.1} parent=1 // pred_fallthru
      _
    %v45 = vld [vmem:[%s0] sm:$0x3]
    %v46 = vld [vmem:[%s1] sm:$0x3]
    %v47 = vld [vmem:[%s2] sm:$0x3]
    %v48 = vld [vmem:[%s3] sm:$0xf]
    %v49 = vld [vmem:[%s4] sm:$0x1]
    %v50 = vld [vmem:[%s5] sm:$0xff]
    %v51 = vld [vmem:[%s5 + $0x8] sm:$0xff]
    %v52 = vld [vmem:[%s5 + $0x10] sm:$0xff]
    %v53 = vld [vmem:[%s5 + $0x18] sm:$0xff]
    %v54 = vld [vmem:[%s6] sm:$0x1]
    %v55 = vld [vmem:[%s7] sm:$0xff]
    %v56 = vld [vmem:[%s7 + $0x8] sm:$0xff]
    %v57 = vld [vmem:[%s7 + $0x10] sm:$0xff]
    %v58 = vld [vmem:[%s7 + $0x18] sm:$0xff]
    %v59 = vld [vmem:[%s8] sm:$0x1]
    %v60 = vld [vmem:[%s9] sm:$0xff]
    %v61 = vld [vmem:[%s9 + $0x8] sm:$0xff]
    %v62 = vld [vmem:[%s9 + $0x10] sm:$0xff]
    %v63 = vld [vmem:[%s9 + $0x18] sm:$0xff]
    %v64 = vld [vmem:[%s10] sm:$0xf]
    %v65 = vld [vmem:[%s11] sm:$0xf]
    %v66 = vld [vmem:[%s12] sm:$0xff]
    %v67 = vld [vmem:[%s12 + $0x8] sm:$0xff]
    %v68 = vld [vmem:[%s12 + $0x10] sm:$0xff]
    %v70 = vlaneseq
    %v71 = vshrl.u32 %v70, 7
    %v72 = vsub.s32 0, %v71
    %v73 = vrot.slane %v49, %v72
    %vm75 = vcmask 31744
    %v77 = vsel %vm75, %v45, 0
    %vm79 = vcmask 1043456
    %v81 = vsel %vm79, %v48, 0
    %83 = vmatprep.subr.mxu0 0.0
    %84 = vmatpush1.msra.mxu0 %v81
    %85 = vmatprep.subr.mxu0 0.0
    %86 = vmatpush1.msra.mxu0 0.0
    %87 = vmatprep.subr.mxu0 0.0
    %88 = vmatpush1.msra.mxu0 0.0
    %89 = vmatprep.subr.mxu0 0.0
    %90 = vmatpush1.msra.mxu0 0.0
    %91 = vmatprep.subr.mxu0 0.0
    %92 = vmatpush1.msra.mxu0 0.0
    %93 = vmatprep.subr.mxu0 0.0
    %94 = vmatpush1.msra.mxu0 0.0
    %95 = vmatprep.subr.mxu0 0.0
    %96 = vmatpush1.msra.mxu0 0.0
    %97 = vmatprep.subr.mxu0 0.0
    %98 = vmatpush1.msra.mxu0 0.0
    %99 = vmatprep.subr.mxu0 0.0
    %100 = vmatpush1.msra.mxu0 0.0
    %101 = vmatprep.subr.mxu0 0.0
    %102 = vmatpush1.msra.mxu0 0.0
    %103 = vmatprep.subr.mxu0 0.0
    %104 = vmatpush1.msra.mxu0 0.0
    %105 = vmatprep.subr.mxu0 0.0
    %106 = vmatpush1.msra.mxu0 0.0
    %107 = vmatprep.subr.mxu0 0.0
    %108 = vmatpush1.msra.mxu0 0.0
    %109 = vmatprep.subr.mxu0 0.0
    %110 = vmatpush1.msra.mxu0 0.0
    %111 = vmatprep.subr.mxu0 0.0
    %112 = vmatpush1.msra.mxu0 0.0
    %113 = vmatprep.subr.mxu0 0.0
    %114 = vmatpush1.msra.mxu0 0.0
    %115 = vmatprep.subr.mxu0 0.0
    %116 = vmatpush1.msra.mxu0 0.0
    %117 = vmatprep.subr.mxu0 0.0
    %118 = vmatpush1.msra.mxu0 0.0
    %119 = vmatprep.subr.mxu0 0.0
    %120 = vmatpush1.msra.mxu0 0.0
    %121 = vmatprep.subr.mxu0 0.0
    %122 = vmatpush1.msra.mxu0 0.0
    %123 = vmatprep.subr.mxu0 0.0
    %124 = vmatpush1.msra.mxu0 0.0
    %125 = vmatprep.subr.mxu0 0.0
    %126 = vmatpush1.msra.mxu0 0.0
    %127 = vmatprep.subr.mxu0 0.0
    %128 = vmatpush1.msra.mxu0 0.0
    %129 = vmatprep.subr.mxu0 0.0
    %130 = vmatpush1.msra.mxu0 0.0
    %131 = vmatprep.subr.mxu0 0.0
    %132 = vmatpush1.msra.mxu0 0.0
    %133 = vmatprep.subr.mxu0 0.0
    %134 = vmatpush1.msra.mxu0 0.0
    %135 = vmatprep.subr.mxu0 0.0
    %136 = vmatpush1.msra.mxu0 0.0
    %137 = vmatprep.subr.mxu0 0.0
    %138 = vmatpush1.msra.mxu0 0.0
    %139 = vmatprep.subr.mxu0 0.0
    %140 = vmatpush1.msra.mxu0 0.0
    %141 = vmatprep.subr.mxu0 0.0
    %142 = vmatpush1.msra.mxu0 0.0
    %143 = vmatprep.subr.mxu0 0.0
    %144 = vmatpush1.msra.mxu0 0.0
    %145 = vmatprep.subr.mxu0 0.0
    %146 = vmatpush1.msra.mxu0 0.0
    %147 = vmatprep.mubr.f32.mxu0 0.0
    %148 = vmatmul.mubr.f32.gmra.mrb[0].mxu0 %v77
    %v149 = vpop.f32.mrb[0].mxu0
    %v150 = vadd.f32 %v73, %v149
    %v151 = vpop.f32.mrb[0].mxu0
    %152 = vdwg.mxu0
    %vm153 = vcmp.gt.f32.partialorder %v150, 0.0
    %v154 = vmul.f32 %v150, 0.01
    %v155 = vsel %vm153, %v150, %v154
    %v157 = vlaneseq
    %v158 = vshrl.u32 %v157, 7
    %v159 = vsub.s32 0, %v158
    %v160 = vrot.slane %v54, %v159
    %vm162 = vcmask 261120
    %v164 = vsel %vm162, %v155, 0
    %166 = vmatprep.subr.mxu0 0.0
    %167 = vmatpush1.msra.mxu0 %v50
    %168 = vmatprep.subr.mxu0 0.0
    %169 = vmatpush1.msra.mxu0 %v51
    %170 = vmatprep.subr.mxu0 0.0
    %171 = vmatpush1.msra.mxu0 %v52
    %172 = vmatprep.subr.mxu0 0.0
    %173 = vmatpush1.msra.mxu0 %v53
    %174 = vmatprep.subr.mxu0 0.0
    %175 = vmatpush1.msra.mxu0 0.0
    %176 = vmatprep.subr.mxu0 0.0
    %177 = vmatpush1.msra.mxu0 0.0
    %178 = vmatprep.subr.mxu0 0.0
    %179 = vmatpush1.msra.mxu0 0.0
    %180 = vmatprep.subr.mxu0 0.0
    %181 = vmatpush1.msra.mxu0 0.0
    %182 = vmatprep.subr.mxu0 0.0
    %183 = vmatpush1.msra.mxu0 0.0
    %184 = vmatprep.subr.mxu0 0.0
    %185 = vmatpush1.msra.mxu0 0.0
    %186 = vmatprep.subr.mxu0 0.0
    %187 = vmatpush1.msra.mxu0 0.0
    %188 = vmatprep.subr.mxu0 0.0
    %189 = vmatpush1.msra.mxu0 0.0
    %190 = vmatprep.subr.mxu0 0.0
    %191 = vmatpush1.msra.mxu0 0.0
    %192 = vmatprep.subr.mxu0 0.0
    %193 = vmatpush1.msra.mxu0 0.0
    %194 = vmatprep.subr.mxu0 0.0
    %195 = vmatpush1.msra.mxu0 0.0
    %196 = vmatprep.subr.mxu0 0.0
    %197 = vmatpush1.msra.mxu0 0.0
    %198 = vmatprep.subr.mxu0 0.0
    %199 = vmatpush1.msra.mxu0 0.0
    %200 = vmatprep.subr.mxu0 0.0
    %201 = vmatpush1.msra.mxu0 0.0
    %202 = vmatprep.subr.mxu0 0.0
    %203 = vmatpush1.msra.mxu0 0.0
    %204 = vmatprep.subr.mxu0 0.0
    %205 = vmatpush1.msra.mxu0 0.0
    %206 = vmatprep.subr.mxu0 0.0
    %207 = vmatpush1.msra.mxu0 0.0
    %208 = vmatprep.subr.mxu0 0.0
    %209 = vmatpush1.msra.mxu0 0.0
    %210 = vmatprep.subr.mxu0 0.0
    %211 = vmatpush1.msra.mxu0 0.0
    %212 = vmatprep.subr.mxu0 0.0
    %213 = vmatpush1.msra.mxu0 0.0
    %214 = vmatprep.subr.mxu0 0.0
    %215 = vmatpush1.msra.mxu0 0.0
    %216 = vmatprep.subr.mxu0 0.0
    %217 = vmatpush1.msra.mxu0 0.0
    %218 = vmatprep.subr.mxu0 0.0
    %219 = vmatpush1.msra.mxu0 0.0
    %220 = vmatprep.subr.mxu0 0.0
    %221 = vmatpush1.msra.mxu0 0.0
    %222 = vmatprep.subr.mxu0 0.0
    %223 = vmatpush1.msra.mxu0 0.0
    %224 = vmatprep.subr.mxu0 0.0
    %225 = vmatpush1.msra.mxu0 0.0
    %226 = vmatprep.subr.mxu0 0.0
    %227 = vmatpush1.msra.mxu0 0.0
    %228 = vmatprep.subr.mxu0 0.0
    %229 = vmatpush1.msra.mxu0 0.0
    %230 = vmatprep.mubr.f32.mxu0 0.0
    %231 = vmatmul.mubr.f32.gmra.mrb[0].mxu0 %v164
    %v232 = vpop.f32.mrb[0].mxu0
    %v233 = vadd.f32 %v160, %v232
    %v234 = vpop.f32.mrb[0].mxu0
    %235 = vdwg.mxu0
    %vm236 = vcmp.gt.f32.partialorder %v233, 0.0
    %v237 = vmul.f32 %v233, 0.01
    %v238 = vsel %vm236, %v233, %v237
    %v240 = vlaneseq
    %v241 = vshrl.u32 %v240, 7
    %v242 = vsub.s32 0, %v241
    %v243 = vrot.slane %v59, %v242
    %v246 = vsel %vm162, %v238, 0
    %248 = vmatprep.subr.mxu0 0.0
    %249 = vmatpush1.msra.mxu0 %v55
    %250 = vmatprep.subr.mxu0 0.0
    %251 = vmatpush1.msra.mxu0 %v56
    %252 = vmatprep.subr.mxu0 0.0
    %253 = vmatpush1.msra.mxu0 %v57
    %254 = vmatprep.subr.mxu0 0.0
    %255 = vmatpush1.msra.mxu0 %v58
    %256 = vmatprep.subr.mxu0 0.0
    %257 = vmatpush1.msra.mxu0 0.0
    %258 = vmatprep.subr.mxu0 0.0
    %259 = vmatpush1.msra.mxu0 0.0
    %260 = vmatprep.subr.mxu0 0.0
    %261 = vmatpush1.msra.mxu0 0.0
    %262 = vmatprep.subr.mxu0 0.0
    %263 = vmatpush1.msra.mxu0 0.0
    %264 = vmatprep.subr.mxu0 0.0
    %265 = vmatpush1.msra.mxu0 0.0
    %266 = vmatprep.subr.mxu0 0.0
    %267 = vmatpush1.msra.mxu0 0.0
    %268 = vmatprep.subr.mxu0 0.0
    %269 = vmatpush1.msra.mxu0 0.0
    %270 = vmatprep.subr.mxu0 0.0
    %271 = vmatpush1.msra.mxu0 0.0
    %272 = vmatprep.subr.mxu0 0.0
    %273 = vmatpush1.msra.mxu0 0.0
    %274 = vmatprep.subr.mxu0 0.0
    %275 = vmatpush1.msra.mxu0 0.0
    %276 = vmatprep.subr.mxu0 0.0
    %277 = vmatpush1.msra.mxu0 0.0
    %278 = vmatprep.subr.mxu0 0.0
    %279 = vmatpush1.msra.mxu0 0.0
    %280 = vmatprep.subr.mxu0 0.0
    %281 = vmatpush1.msra.mxu0 0.0
    %282 = vmatprep.subr.mxu0 0.0
    %283 = vmatpush1.msra.mxu0 0.0
    %284 = vmatprep.subr.mxu0 0.0
    %285 = vmatpush1.msra.mxu0 0.0
    %286 = vmatprep.subr.mxu0 0.0
    %287 = vmatpush1.msra.mxu0 0.0
    %288 = vmatprep.subr.mxu0 0.0
    %289 = vmatpush1.msra.mxu0 0.0
    %290 = vmatprep.subr.mxu0 0.0
    %291 = vmatpush1.msra.mxu0 0.0
    %292 = vmatprep.subr.mxu0 0.0
    %293 = vmatpush1.msra.mxu0 0.0
    %294 = vmatprep.subr.mxu0 0.0
    %295 = vmatpush1.msra.mxu0 0.0
    %296 = vmatprep.subr.mxu0 0.0
    %297 = vmatpush1.msra.mxu0 0.0
    %298 = vmatprep.subr.mxu0 0.0
    %299 = vmatpush1.msra.mxu0 0.0
    %300 = vmatprep.subr.mxu0 0.0
    %301 = vmatpush1.msra.mxu0 0.0
    %302 = vmatprep.subr.mxu0 0.0
    %303 = vmatpush1.msra.mxu0 0.0
    %304 = vmatprep.subr.mxu0 0.0
    %305 = vmatpush1.msra.mxu0 0.0
    %306 = vmatprep.subr.mxu0 0.0
    %307 = vmatpush1.msra.mxu0 0.0
    %308 = vmatprep.subr.mxu0 0.0
    %309 = vmatpush1.msra.mxu0 0.0
    %310 = vmatprep.subr.mxu0 0.0
    %311 = vmatpush1.msra.mxu0 0.0
    %312 = vmatprep.mubr.f32.mxu0 0.0
    %313 = vmatmul.mubr.f32.gmra.mrb[0].mxu0 %v246
    %v314 = vpop.f32.mrb[0].mxu0
    %v315 = vadd.f32 %v243, %v314
    %v316 = vpop.f32.mrb[0].mxu0
    %317 = vdwg.mxu0
    %v318 = vand.u32 2147483647, %v315
    %v319 = vsub.f32 0.0, %v318
    %v320 = vmul.f32 %v319, 1.442695
    %v321 = vpow.pop %v320
    %v322 = vmax.f32 %v315, 0.0
    %v323 = vadd.f32 %v321, 1.0
    %v324 = vlog2.pop %v323
    %v325 = vmul.f32 %v324, 0.6931472
    %v326 = vadd.f32 %v322, %v325
    %vm327 = vcmp.gt.f32.partialorder %v315, 0.0
    %v328 = vsel %vm327, 1.0, %v321
    %v329 = vrcp.pop %v323
    %v330 = vmul.f32 %v328, %v329
    %vm331 = vcmp.gt.f32.partialorder %v155, 0.0
    %v332 = vsel %vm331, 1.0, -0.01
    %vm333 = vcmp.gt.f32.partialorder %v238, 0.0
    %v334 = vsel %vm333, 1.0, -0.01
    %v335 = vlaneseq
    %v336 = vshrl.u32 %v335, 7
    %v337 = vsub.s32 0, %v336
    %v338 = vrot.slane %v48, %v337
    %v339 = vmul.f32 %v332, %v338
    %v341 = vsel %vm162, %v339, 0
    %343 = vmatprep.subr.mxu0 0.0
    %344 = vmatpush1.msra.mxu0 %v50
    %345 = vmatprep.subr.mxu0 0.0
    %346 = vmatpush1.msra.mxu0 %v51
    %347 = vmatprep.subr.mxu0 0.0
    %348 = vmatpush1.msra.mxu0 %v52
    %349 = vmatprep.subr.mxu0 0.0
    %350 = vmatpush1.msra.mxu0 %v53
    %351 = vmatprep.subr.mxu0 0.0
    %352 = vmatpush1.msra.mxu0 0.0
    %353 = vmatprep.subr.mxu0 0.0
    %354 = vmatpush1.msra.mxu0 0.0
    %355 = vmatprep.subr.mxu0 0.0
    %356 = vmatpush1.msra.mxu0 0.0
    %357 = vmatprep.subr.mxu0 0.0
    %358 = vmatpush1.msra.mxu0 0.0
    %359 = vmatprep.subr.mxu0 0.0
    %360 = vmatpush1.msra.mxu0 0.0
    %361 = vmatprep.subr.mxu0 0.0
    %362 = vmatpush1.msra.mxu0 0.0
    %363 = vmatprep.subr.mxu0 0.0
    %364 = vmatpush1.msra.mxu0 0.0
    %365 = vmatprep.subr.mxu0 0.0
    %366 = vmatpush1.msra.mxu0 0.0
    %367 = vmatprep.subr.mxu0 0.0
    %368 = vmatpush1.msra.mxu0 0.0
    %369 = vmatprep.subr.mxu0 0.0
    %370 = vmatpush1.msra.mxu0 0.0
    %371 = vmatprep.subr.mxu0 0.0
    %372 = vmatpush1.msra.mxu0 0.0
    %373 = vmatprep.subr.mxu0 0.0
    %374 = vmatpush1.msra.mxu0 0.0
    %375 = vmatprep.subr.mxu0 0.0
    %376 = vmatpush1.msra.mxu0 0.0
    %377 = vmatprep.subr.mxu0 0.0
    %378 = vmatpush1.msra.mxu0 0.0
    %379 = vmatprep.subr.mxu0 0.0
    %380 = vmatpush1.msra.mxu0 0.0
    %381 = vmatprep.subr.mxu0 0.0
    %382 = vmatpush1.msra.mxu0 0.0
    %383 = vmatprep.subr.mxu0 0.0
    %384 = vmatpush1.msra.mxu0 0.0
    %385 = vmatprep.subr.mxu0 0.0
    %386 = vmatpush1.msra.mxu0 0.0
    %387 = vmatprep.subr.mxu0 0.0
    %388 = vmatpush1.msra.mxu0 0.0
    %389 = vmatprep.subr.mxu0 0.0
    %390 = vmatpush1.msra.mxu0 0.0
    %391 = vmatprep.subr.mxu0 0.0
    %392 = vmatpush1.msra.mxu0 0.0
    %393 = vmatprep.subr.mxu0 0.0
    %394 = vmatpush1.msra.mxu0 0.0
    %395 = vmatprep.subr.mxu0 0.0
    %396 = vmatpush1.msra.mxu0 0.0
    %397 = vmatprep.subr.mxu0 0.0
    %398 = vmatpush1.msra.mxu0 0.0
    %399 = vmatprep.subr.mxu0 0.0
    %400 = vmatpush1.msra.mxu0 0.0
    %401 = vmatprep.subr.mxu0 0.0
    %402 = vmatpush1.msra.mxu0 0.0
    %403 = vmatprep.subr.mxu0 0.0
    %404 = vmatpush1.msra.mxu0 0.0
    %405 = vmatprep.subr.mxu0 0.0
    %406 = vmatpush1.msra.mxu0 0.0
    %407 = vmatprep.mubr.f32.mxu0 0.0
    %408 = vmatmul.mubr.f32.gmra.mrb[0].mxu0 %v341
    %v409 = vpop.f32.mrb[0].mxu0
    %v410 = vadd.f32 0.0, %v409
    %v411 = vpop.f32.mrb[0].mxu0
    %412 = vdwg.mxu0
    %v413 = vmul.f32 %v334, %v410
    %v415 = vsel %vm162, %v413, 0
    %417 = vmatprep.subr.mxu0 0.0
    %418 = vmatpush1.msra.mxu0 %v60
    %419 = vmatprep.subr.mxu0 0.0
    %420 = vmatpush1.msra.mxu0 %v61
    %421 = vmatprep.subr.mxu0 0.0
    %422 = vmatpush1.msra.mxu0 %v62
    %423 = vmatprep.subr.mxu0 0.0
    %424 = vmatpush1.msra.mxu0 %v63
    %425 = vmatprep.subr.mxu0 0.0
    %426 = vmatpush1.msra.mxu0 0.0
    %427 = vmatprep.subr.mxu0 0.0
    %428 = vmatpush1.msra.mxu0 0.0
    %429 = vmatprep.subr.mxu0 0.0
    %430 = vmatpush1.msra.mxu0 0.0
    %431 = vmatprep.subr.mxu0 0.0
    %432 = vmatpush1.msra.mxu0 0.0
    %433 = vmatprep.subr.mxu0 0.0
    %434 = vmatpush1.msra.mxu0 0.0
    %435 = vmatprep.subr.mxu0 0.0
    %436 = vmatpush1.msra.mxu0 0.0
    %437 = vmatprep.subr.mxu0 0.0
    %438 = vmatpush1.msra.mxu0 0.0
    %439 = vmatprep.subr.mxu0 0.0
    %440 = vmatpush1.msra.mxu0 0.0
    %441 = vmatprep.subr.mxu0 0.0
    %442 = vmatpush1.msra.mxu0 0.0
    %443 = vmatprep.subr.mxu0 0.0
    %444 = vmatpush1.msra.mxu0 0.0
    %445 = vmatprep.subr.mxu0 0.0
    %446 = vmatpush1.msra.mxu0 0.0
    %447 = vmatprep.subr.mxu0 0.0
    %448 = vmatpush1.msra.mxu0 0.0
    %449 = vmatprep.subr.mxu0 0.0
    %450 = vmatpush1.msra.mxu0 0.0
    %451 = vmatprep.subr.mxu0 0.0
    %452 = vmatpush1.msra.mxu0 0.0
    %453 = vmatprep.subr.mxu0 0.0
    %454 = vmatpush1.msra.mxu0 0.0
    %455 = vmatprep.subr.mxu0 0.0
    %456 = vmatpush1.msra.mxu0 0.0
    %457 = vmatprep.subr.mxu0 0.0
    %458 = vmatpush1.msra.mxu0 0.0
    %459 = vmatprep.subr.mxu0 0.0
    %460 = vmatpush1.msra.mxu0 0.0
    %461 = vmatprep.subr.mxu0 0.0
    %462 = vmatpush1.msra.mxu0 0.0
    %463 = vmatprep.subr.mxu0 0.0
    %464 = vmatpush1.msra.mxu0 0.0
    %465 = vmatprep.subr.mxu0 0.0
    %466 = vmatpush1.msra.mxu0 0.0
    %467 = vmatprep.subr.mxu0 0.0
    %468 = vmatpush1.msra.mxu0 0.0
    %469 = vmatprep.subr.mxu0 0.0
    %470 = vmatpush1.msra.mxu0 0.0
    %471 = vmatprep.subr.mxu0 0.0
    %472 = vmatpush1.msra.mxu0 0.0
    %473 = vmatprep.subr.mxu0 0.0
    %474 = vmatpush1.msra.mxu0 0.0
    %475 = vmatprep.subr.mxu0 0.0
    %476 = vmatpush1.msra.mxu0 0.0
    %477 = vmatprep.subr.mxu0 0.0
    %478 = vmatpush1.msra.mxu0 0.0
    %479 = vmatprep.subr.mxu0 0.0
    %480 = vmatpush1.msra.mxu0 0.0
    %481 = vmatprep.mubr.f32.mxu0 0.0
    %482 = vmatmul.mubr.f32.gmra.mrb[0].mxu0 %v415
    %v483 = vpop.f32.mrb[0].mxu0
    %v484 = vadd.f32 0.0, %v483
    %v485 = vpop.f32.mrb[0].mxu0
    %486 = vdwg.mxu0
    %v487 = vmul.f32 %v330, %v484
    %489 = vset.pattern.permute.xlu0 0
    %490 = vperm.xlu0 %489, %v46
    %v491 = vpop.permute.xlu0 %490
    %v493 = vmul.f32 %v491, %v487
    %v494 = vadd.f32 %v493, 0.0
    %v495 = vmul.f32 %v491, %v484
    %v496 = vadd.f32 %v495, 0.0
    %v497 = vlaneseq
    %v498 = vshrl.u32 %v497, 7
    %v499 = vsub.s32 1, %v498
    %v500 = vrot.slane %v48, %v499
    %v501 = vmul.f32 %v332, %v500
    %v503 = vsel %vm162, %v501, 0
    %505 = vmatprep.subr.mxu0 0.0
    %506 = vmatpush1.msra.mxu0 %v50
    %507 = vmatprep.subr.mxu0 0.0
    %508 = vmatpush1.msra.mxu0 %v51
    %509 = vmatprep.subr.mxu0 0.0
    %510 = vmatpush1.msra.mxu0 %v52
    %511 = vmatprep.subr.mxu0 0.0
    %512 = vmatpush1.msra.mxu0 %v53
    %513 = vmatprep.subr.mxu0 0.0
    %514 = vmatpush1.msra.mxu0 0.0
    %515 = vmatprep.subr.mxu0 0.0
    %516 = vmatpush1.msra.mxu0 0.0
    %517 = vmatprep.subr.mxu0 0.0
    %518 = vmatpush1.msra.mxu0 0.0
    %519 = vmatprep.subr.mxu0 0.0
    %520 = vmatpush1.msra.mxu0 0.0
    %521 = vmatprep.subr.mxu0 0.0
    %522 = vmatpush1.msra.mxu0 0.0
    %523 = vmatprep.subr.mxu0 0.0
    %524 = vmatpush1.msra.mxu0 0.0
    %525 = vmatprep.subr.mxu0 0.0
    %526 = vmatpush1.msra.mxu0 0.0
    %527 = vmatprep.subr.mxu0 0.0
    %528 = vmatpush1.msra.mxu0 0.0
    %529 = vmatprep.subr.mxu0 0.0
    %530 = vmatpush1.msra.mxu0 0.0
    %531 = vmatprep.subr.mxu0 0.0
    %532 = vmatpush1.msra.mxu0 0.0
    %533 = vmatprep.subr.mxu0 0.0
    %534 = vmatpush1.msra.mxu0 0.0
    %535 = vmatprep.subr.mxu0 0.0
    %536 = vmatpush1.msra.mxu0 0.0
    %537 = vmatprep.subr.mxu0 0.0
    %538 = vmatpush1.msra.mxu0 0.0
    %539 = vmatprep.subr.mxu0 0.0
    %540 = vmatpush1.msra.mxu0 0.0
    %541 = vmatprep.subr.mxu0 0.0
    %542 = vmatpush1.msra.mxu0 0.0
    %543 = vmatprep.subr.mxu0 0.0
    %544 = vmatpush1.msra.mxu0 0.0
    %545 = vmatprep.subr.mxu0 0.0
    %546 = vmatpush1.msra.mxu0 0.0
    %547 = vmatprep.subr.mxu0 0.0
    %548 = vmatpush1.msra.mxu0 0.0
    %549 = vmatprep.subr.mxu0 0.0
    %550 = vmatpush1.msra.mxu0 0.0
    %551 = vmatprep.subr.mxu0 0.0
    %552 = vmatpush1.msra.mxu0 0.0
    %553 = vmatprep.subr.mxu0 0.0
    %554 = vmatpush1.msra.mxu0 0.0
    %555 = vmatprep.subr.mxu0 0.0
    %556 = vmatpush1.msra.mxu0 0.0
    %557 = vmatprep.subr.mxu0 0.0
    %558 = vmatpush1.msra.mxu0 0.0
    %559 = vmatprep.subr.mxu0 0.0
    %560 = vmatpush1.msra.mxu0 0.0
    %561 = vmatprep.subr.mxu0 0.0
    %562 = vmatpush1.msra.mxu0 0.0
    %563 = vmatprep.subr.mxu0 0.0
    %564 = vmatpush1.msra.mxu0 0.0
    %565 = vmatprep.subr.mxu0 0.0
    %566 = vmatpush1.msra.mxu0 0.0
    %567 = vmatprep.subr.mxu0 0.0
    %568 = vmatpush1.msra.mxu0 0.0
    %569 = vmatprep.mubr.f32.mxu0 0.0
    %570 = vmatmul.mubr.f32.gmra.mrb[0].mxu0 %v503
    %v571 = vpop.f32.mrb[0].mxu0
    %v572 = vadd.f32 0.0, %v571
    %v573 = vpop.f32.mrb[0].mxu0
    %574 = vdwg.mxu0
    %v575 = vmul.f32 %v334, %v572
    %v577 = vsel %vm162, %v575, 0
    %579 = vmatprep.subr.mxu0 0.0
    %580 = vmatpush1.msra.mxu0 %v60
    %581 = vmatprep.subr.mxu0 0.0
    %582 = vmatpush1.msra.mxu0 %v61
    %583 = vmatprep.subr.mxu0 0.0
    %584 = vmatpush1.msra.mxu0 %v62
    %585 = vmatprep.subr.mxu0 0.0
    %586 = vmatpush1.msra.mxu0 %v63
    %587 = vmatprep.subr.mxu0 0.0
    %588 = vmatpush1.msra.mxu0 0.0
    %589 = vmatprep.subr.mxu0 0.0
    %590 = vmatpush1.msra.mxu0 0.0
    %591 = vmatprep.subr.mxu0 0.0
    %592 = vmatpush1.msra.mxu0 0.0
    %593 = vmatprep.subr.mxu0 0.0
    %594 = vmatpush1.msra.mxu0 0.0
    %595 = vmatprep.subr.mxu0 0.0
    %596 = vmatpush1.msra.mxu0 0.0
    %597 = vmatprep.subr.mxu0 0.0
    %598 = vmatpush1.msra.mxu0 0.0
    %599 = vmatprep.subr.mxu0 0.0
    %600 = vmatpush1.msra.mxu0 0.0
    %601 = vmatprep.subr.mxu0 0.0
    %602 = vmatpush1.msra.mxu0 0.0
    %603 = vmatprep.subr.mxu0 0.0
    %604 = vmatpush1.msra.mxu0 0.0
    %605 = vmatprep.subr.mxu0 0.0
    %606 = vmatpush1.msra.mxu0 0.0
    %607 = vmatprep.subr.mxu0 0.0
    %608 = vmatpush1.msra.mxu0 0.0
    %609 = vmatprep.subr.mxu0 0.0
    %610 = vmatpush1.msra.mxu0 0.0
    %611 = vmatprep.subr.mxu0 0.0
    %612 = vmatpush1.msra.mxu0 0.0
    %613 = vmatprep.subr.mxu0 0.0
    %614 = vmatpush1.msra.mxu0 0.0
    %615 = vmatprep.subr.mxu0 0.0
    %616 = vmatpush1.msra.mxu0 0.0
    %617 = vmatprep.subr.mxu0 0.0
    %618 = vmatpush1.msra.mxu0 0.0
    %619 = vmatprep.subr.mxu0 0.0
    %620 = vmatpush1.msra.mxu0 0.0
    %621 = vmatprep.subr.mxu0 0.0
    %622 = vmatpush1.msra.mxu0 0.0
    %623 = vmatprep.subr.mxu0 0.0
    %624 = vmatpush1.msra.mxu0 0.0
    %625 = vmatprep.subr.mxu0 0.0
    %626 = vmatpush1.msra.mxu0 0.0
    %627 = vmatprep.subr.mxu0 0.0
    %628 = vmatpush1.msra.mxu0 0.0
    %629 = vmatprep.subr.mxu0 0.0
    %630 = vmatpush1.msra.mxu0 0.0
    %631 = vmatprep.subr.mxu0 0.0
    %632 = vmatpush1.msra.mxu0 0.0
    %633 = vmatprep.subr.mxu0 0.0
    %634 = vmatpush1.msra.mxu0 0.0
    %635 = vmatprep.subr.mxu0 0.0
    %636 = vmatpush1.msra.mxu0 0.0
    %637 = vmatprep.subr.mxu0 0.0
    %638 = vmatpush1.msra.mxu0 0.0
    %639 = vmatprep.subr.mxu0 0.0
    %640 = vmatpush1.msra.mxu0 0.0
    %641 = vmatprep.subr.mxu0 0.0
    %642 = vmatpush1.msra.mxu0 0.0
    %643 = vmatprep.mubr.f32.mxu0 0.0
    %644 = vmatmul.mubr.f32.gmra.mrb[0].mxu0 %v577
    %v645 = vpop.f32.mrb[0].mxu0
    %v646 = vadd.f32 0.0, %v645
    %v647 = vpop.f32.mrb[0].mxu0
    %648 = vdwg.mxu0
    %v649 = vmul.f32 %v330, %v646
    %650 = vset.pattern.permute.xlu0 1
    %651 = vperm.xlu0 %650, %v46
    %v652 = vpop.permute.xlu0 %651
    %v654 = vmul.f32 %v652, %v649
    %v655 = vadd.f32 %v494, %v654
    %v656 = vmul.f32 %v652, %v646
    %v657 = vadd.f32 %v496, %v656
    %v658 = vlaneseq
    %v659 = vshrl.u32 %v658, 7
    %v660 = vsub.s32 2, %v659
    %v661 = vrot.slane %v48, %v660
    %v662 = vmul.f32 %v332, %v661
    %v664 = vsel %vm162, %v662, 0
    %666 = vmatprep.subr.mxu0 0.0
    %667 = vmatpush1.msra.mxu0 %v50
    %668 = vmatprep.subr.mxu0 0.0
    %669 = vmatpush1.msra.mxu0 %v51
    %670 = vmatprep.subr.mxu0 0.0
    %671 = vmatpush1.msra.mxu0 %v52
    %672 = vmatprep.subr.mxu0 0.0
    %673 = vmatpush1.msra.mxu0 %v53
    %674 = vmatprep.subr.mxu0 0.0
    %675 = vmatpush1.msra.mxu0 0.0
    %676 = vmatprep.subr.mxu0 0.0
    %677 = vmatpush1.msra.mxu0 0.0
    %678 = vmatprep.subr.mxu0 0.0
    %679 = vmatpush1.msra.mxu0 0.0
    %680 = vmatprep.subr.mxu0 0.0
    %681 = vmatpush1.msra.mxu0 0.0
    %682 = vmatprep.subr.mxu0 0.0
    %683 = vmatpush1.msra.mxu0 0.0
    %684 = vmatprep.subr.mxu0 0.0
    %685 = vmatpush1.msra.mxu0 0.0
    %686 = vmatprep.subr.mxu0 0.0
    %687 = vmatpush1.msra.mxu0 0.0
    %688 = vmatprep.subr.mxu0 0.0
    %689 = vmatpush1.msra.mxu0 0.0
    %690 = vmatprep.subr.mxu0 0.0
    %691 = vmatpush1.msra.mxu0 0.0
    %692 = vmatprep.subr.mxu0 0.0
    %693 = vmatpush1.msra.mxu0 0.0
    %694 = vmatprep.subr.mxu0 0.0
    %695 = vmatpush1.msra.mxu0 0.0
    %696 = vmatprep.subr.mxu0 0.0
    %697 = vmatpush1.msra.mxu0 0.0
    %698 = vmatprep.subr.mxu0 0.0
    %699 = vmatpush1.msra.mxu0 0.0
    %700 = vmatprep.subr.mxu0 0.0
    %701 = vmatpush1.msra.mxu0 0.0
    %702 = vmatprep.subr.mxu0 0.0
    %703 = vmatpush1.msra.mxu0 0.0
    %704 = vmatprep.subr.mxu0 0.0
    %705 = vmatpush1.msra.mxu0 0.0
    %706 = vmatprep.subr.mxu0 0.0
    %707 = vmatpush1.msra.mxu0 0.0
    %708 = vmatprep.subr.mxu0 0.0
    %709 = vmatpush1.msra.mxu0 0.0
    %710 = vmatprep.subr.mxu0 0.0
    %711 = vmatpush1.msra.mxu0 0.0
    %712 = vmatprep.subr.mxu0 0.0
    %713 = vmatpush1.msra.mxu0 0.0
    %714 = vmatprep.subr.mxu0 0.0
    %715 = vmatpush1.msra.mxu0 0.0
    %716 = vmatprep.subr.mxu0 0.0
    %717 = vmatpush1.msra.mxu0 0.0
    %718 = vmatprep.subr.mxu0 0.0
    %719 = vmatpush1.msra.mxu0 0.0
    %720 = vmatprep.subr.mxu0 0.0
    %721 = vmatpush1.msra.mxu0 0.0
    %722 = vmatprep.subr.mxu0 0.0
    %723 = vmatpush1.msra.mxu0 0.0
    %724 = vmatprep.subr.mxu0 0.0
    %725 = vmatpush1.msra.mxu0 0.0
    %726 = vmatprep.subr.mxu0 0.0
    %727 = vmatpush1.msra.mxu0 0.0
    %728 = vmatprep.subr.mxu0 0.0
    %729 = vmatpush1.msra.mxu0 0.0
    %730 = vmatprep.mubr.f32.mxu0 0.0
    %731 = vmatmul.mubr.f32.gmra.mrb[0].mxu0 %v664
    %v732 = vpop.f32.mrb[0].mxu0
    %v733 = vadd.f32 0.0, %v732
    %v734 = vpop.f32.mrb[0].mxu0
    %735 = vdwg.mxu0
    %v736 = vmul.f32 %v334, %v733
    %v738 = vsel %vm162, %v736, 0
    %740 = vmatprep.subr.mxu0 0.0
    %741 = vmatpush1.msra.mxu0 %v60
    %742 = vmatprep.subr.mxu0 0.0
    %743 = vmatpush1.msra.mxu0 %v61
    %744 = vmatprep.subr.mxu0 0.0
    %745 = vmatpush1.msra.mxu0 %v62
    %746 = vmatprep.subr.mxu0 0.0
    %747 = vmatpush1.msra.mxu0 %v63
    %748 = vmatprep.subr.mxu0 0.0
    %749 = vmatpush1.msra.mxu0 0.0
    %750 = vmatprep.subr.mxu0 0.0
    %751 = vmatpush1.msra.mxu0 0.0
    %752 = vmatprep.subr.mxu0 0.0
    %753 = vmatpush1.msra.mxu0 0.0
    %754 = vmatprep.subr.mxu0 0.0
    %755 = vmatpush1.msra.mxu0 0.0
    %756 = vmatprep.subr.mxu0 0.0
    %757 = vmatpush1.msra.mxu0 0.0
    %758 = vmatprep.subr.mxu0 0.0
    %759 = vmatpush1.msra.mxu0 0.0
    %760 = vmatprep.subr.mxu0 0.0
    %761 = vmatpush1.msra.mxu0 0.0
    %762 = vmatprep.subr.mxu0 0.0
    %763 = vmatpush1.msra.mxu0 0.0
    %764 = vmatprep.subr.mxu0 0.0
    %765 = vmatpush1.msra.mxu0 0.0
    %766 = vmatprep.subr.mxu0 0.0
    %767 = vmatpush1.msra.mxu0 0.0
    %768 = vmatprep.subr.mxu0 0.0
    %769 = vmatpush1.msra.mxu0 0.0
    %770 = vmatprep.subr.mxu0 0.0
    %771 = vmatpush1.msra.mxu0 0.0
    %772 = vmatprep.subr.mxu0 0.0
    %773 = vmatpush1.msra.mxu0 0.0
    %774 = vmatprep.subr.mxu0 0.0
    %775 = vmatpush1.msra.mxu0 0.0
    %776 = vmatprep.subr.mxu0 0.0
    %777 = vmatpush1.msra.mxu0 0.0
    %778 = vmatprep.subr.mxu0 0.0
    %779 = vmatpush1.msra.mxu0 0.0
    %780 = vmatprep.subr.mxu0 0.0
    %781 = vmatpush1.msra.mxu0 0.0
    %782 = vmatprep.subr.mxu0 0.0
    %783 = vmatpush1.msra.mxu0 0.0
    %784 = vmatprep.subr.mxu0 0.0
    %785 = vmatpush1.msra.mxu0 0.0
    %786 = vmatprep.subr.mxu0 0.0
    %787 = vmatpush1.msra.mxu0 0.0
    %788 = vmatprep.subr.mxu0 0.0
    %789 = vmatpush1.msra.mxu0 0.0
    %790 = vmatprep.subr.mxu0 0.0
    %791 = vmatpush1.msra.mxu0 0.0
    %792 = vmatprep.subr.mxu0 0.0
    %793 = vmatpush1.msra.mxu0 0.0
    %794 = vmatprep.subr.mxu0 0.0
    %795 = vmatpush1.msra.mxu0 0.0
    %796 = vmatprep.subr.mxu0 0.0
    %797 = vmatpush1.msra.mxu0 0.0
    %798 = vmatprep.subr.mxu0 0.0
    %799 = vmatpush1.msra.mxu0 0.0
    %800 = vmatprep.subr.mxu0 0.0
    %801 = vmatpush1.msra.mxu0 0.0
    %802 = vmatprep.subr.mxu0 0.0
    %803 = vmatpush1.msra.mxu0 0.0
    %804 = vmatprep.mubr.f32.mxu0 0.0
    %805 = vmatmul.mubr.f32.gmra.mrb[0].mxu0 %v738
    %v806 = vpop.f32.mrb[0].mxu0
    %v807 = vadd.f32 0.0, %v806
    %v808 = vpop.f32.mrb[0].mxu0
    %809 = vdwg.mxu0
    %v810 = vmul.f32 %v330, %v807
    %811 = vset.pattern.permute.xlu0 2
    %812 = vperm.xlu0 %811, %v46
    %v813 = vpop.permute.xlu0 %812
    %v815 = vmul.f32 %v813, %v810
    %v816 = vadd.f32 %v655, %v815
    %v817 = vmul.f32 %v813, %v807
    %v818 = vadd.f32 %v657, %v817
    %v819 = vlaneseq
    %v820 = vshrl.u32 %v819, 7
    %v821 = vsub.s32 3, %v820
    %v822 = vrot.slane %v48, %v821
    %v823 = vmul.f32 %v332, %v822
    %v825 = vsel %vm162, %v823, 0
    %827 = vmatprep.subr.mxu0 0.0
    %828 = vmatpush1.msra.mxu0 %v50
    %829 = vmatprep.subr.mxu0 0.0
    %830 = vmatpush1.msra.mxu0 %v51
    %831 = vmatprep.subr.mxu0 0.0
    %832 = vmatpush1.msra.mxu0 %v52
    %833 = vmatprep.subr.mxu0 0.0
    %834 = vmatpush1.msra.mxu0 %v53
    %835 = vmatprep.subr.mxu0 0.0
    %836 = vmatpush1.msra.mxu0 0.0
    %837 = vmatprep.subr.mxu0 0.0
    %838 = vmatpush1.msra.mxu0 0.0
    %839 = vmatprep.subr.mxu0 0.0
    %840 = vmatpush1.msra.mxu0 0.0
    %841 = vmatprep.subr.mxu0 0.0
    %842 = vmatpush1.msra.mxu0 0.0
    %843 = vmatprep.subr.mxu0 0.0
    %844 = vmatpush1.msra.mxu0 0.0
    %845 = vmatprep.subr.mxu0 0.0
    %846 = vmatpush1.msra.mxu0 0.0
    %847 = vmatprep.subr.mxu0 0.0
    %848 = vmatpush1.msra.mxu0 0.0
    %849 = vmatprep.subr.mxu0 0.0
    %850 = vmatpush1.msra.mxu0 0.0
    %851 = vmatprep.subr.mxu0 0.0
    %852 = vmatpush1.msra.mxu0 0.0
    %853 = vmatprep.subr.mxu0 0.0
    %854 = vmatpush1.msra.mxu0 0.0
    %855 = vmatprep.subr.mxu0 0.0
    %856 = vmatpush1.msra.mxu0 0.0
    %857 = vmatprep.subr.mxu0 0.0
    %858 = vmatpush1.msra.mxu0 0.0
    %859 = vmatprep.subr.mxu0 0.0
    %860 = vmatpush1.msra.mxu0 0.0
    %861 = vmatprep.subr.mxu0 0.0
    %862 = vmatpush1.msra.mxu0 0.0
    %863 = vmatprep.subr.mxu0 0.0
    %864 = vmatpush1.msra.mxu0 0.0
    %865 = vmatprep.subr.mxu0 0.0
    %866 = vmatpush1.msra.mxu0 0.0
    %867 = vmatprep.subr.mxu0 0.0
    %868 = vmatpush1.msra.mxu0 0.0
    %869 = vmatprep.subr.mxu0 0.0
    %870 = vmatpush1.msra.mxu0 0.0
    %871 = vmatprep.subr.mxu0 0.0
    %872 = vmatpush1.msra.mxu0 0.0
    %873 = vmatprep.subr.mxu0 0.0
    %874 = vmatpush1.msra.mxu0 0.0
    %875 = vmatprep.subr.mxu0 0.0
    %876 = vmatpush1.msra.mxu0 0.0
    %877 = vmatprep.subr.mxu0 0.0
    %878 = vmatpush1.msra.mxu0 0.0
    %879 = vmatprep.subr.mxu0 0.0
    %880 = vmatpush1.msra.mxu0 0.0
    %881 = vmatprep.subr.mxu0 0.0
    %882 = vmatpush1.msra.mxu0 0.0
    %883 = vmatprep.subr.mxu0 0.0
    %884 = vmatpush1.msra.mxu0 0.0
    %885 = vmatprep.subr.mxu0 0.0
    %886 = vmatpush1.msra.mxu0 0.0
    %887 = vmatprep.subr.mxu0 0.0
    %888 = vmatpush1.msra.mxu0 0.0
    %889 = vmatprep.subr.mxu0 0.0
    %890 = vmatpush1.msra.mxu0 0.0
    %891 = vmatprep.mubr.f32.mxu0 0.0
    %892 = vmatmul.mubr.f32.gmra.mrb[0].mxu0 %v825
    %v893 = vpop.f32.mrb[0].mxu0
    %v894 = vadd.f32 0.0, %v893
    %v895 = vpop.f32.mrb[0].mxu0
    %896 = vdwg.mxu0
    %v897 = vmul.f32 %v334, %v894
    %v899 = vsel %vm162, %v897, 0
    %901 = vmatprep.subr.mxu0 0.0
    %902 = vmatpush1.msra.mxu0 %v60
    %903 = vmatprep.subr.mxu0 0.0
    %904 = vmatpush1.msra.mxu0 %v61
    %905 = vmatprep.subr.mxu0 0.0
    %906 = vmatpush1.msra.mxu0 %v62
    %907 = vmatprep.subr.mxu0 0.0
    %908 = vmatpush1.msra.mxu0 %v63
    %909 = vmatprep.subr.mxu0 0.0
    %910 = vmatpush1.msra.mxu0 0.0
    %911 = vmatprep.subr.mxu0 0.0
    %912 = vmatpush1.msra.mxu0 0.0
    %913 = vmatprep.subr.mxu0 0.0
    %914 = vmatpush1.msra.mxu0 0.0
    %915 = vmatprep.subr.mxu0 0.0
    %916 = vmatpush1.msra.mxu0 0.0
    %917 = vmatprep.subr.mxu0 0.0
    %918 = vmatpush1.msra.mxu0 0.0
    %919 = vmatprep.subr.mxu0 0.0
    %920 = vmatpush1.msra.mxu0 0.0
    %921 = vmatprep.subr.mxu0 0.0
    %922 = vmatpush1.msra.mxu0 0.0
    %923 = vmatprep.subr.mxu0 0.0
    %924 = vmatpush1.msra.mxu0 0.0
    %925 = vmatprep.subr.mxu0 0.0
    %926 = vmatpush1.msra.mxu0 0.0
    %927 = vmatprep.subr.mxu0 0.0
    %928 = vmatpush1.msra.mxu0 0.0
    %929 = vmatprep.subr.mxu0 0.0
    %930 = vmatpush1.msra.mxu0 0.0
    %931 = vmatprep.subr.mxu0 0.0
    %932 = vmatpush1.msra.mxu0 0.0
    %933 = vmatprep.subr.mxu0 0.0
    %934 = vmatpush1.msra.mxu0 0.0
    %935 = vmatprep.subr.mxu0 0.0
    %936 = vmatpush1.msra.mxu0 0.0
    %937 = vmatprep.subr.mxu0 0.0
    %938 = vmatpush1.msra.mxu0 0.0
    %939 = vmatprep.subr.mxu0 0.0
    %940 = vmatpush1.msra.mxu0 0.0
    %941 = vmatprep.subr.mxu0 0.0
    %942 = vmatpush1.msra.mxu0 0.0
    %943 = vmatprep.subr.mxu0 0.0
    %944 = vmatpush1.msra.mxu0 0.0
    %945 = vmatprep.subr.mxu0 0.0
    %946 = vmatpush1.msra.mxu0 0.0
    %947 = vmatprep.subr.mxu0 0.0
    %948 = vmatpush1.msra.mxu0 0.0
    %949 = vmatprep.subr.mxu0 0.0
    %950 = vmatpush1.msra.mxu0 0.0
    %951 = vmatprep.subr.mxu0 0.0
    %952 = vmatpush1.msra.mxu0 0.0
    %953 = vmatprep.subr.mxu0 0.0
    %954 = vmatpush1.msra.mxu0 0.0
    %955 = vmatprep.subr.mxu0 0.0
    %956 = vmatpush1.msra.mxu0 0.0
    %957 = vmatprep.subr.mxu0 0.0
    %958 = vmatpush1.msra.mxu0 0.0
    %959 = vmatprep.subr.mxu0 0.0
    %960 = vmatpush1.msra.mxu0 0.0
    %961 = vmatprep.subr.mxu0 0.0
    %962 = vmatpush1.msra.mxu0 0.0
    %963 = vmatprep.subr.mxu0 0.0
    %964 = vmatpush1.msra.mxu0 0.0
    %965 = vmatprep.mubr.f32.mxu0 0.0
    %966 = vmatmul.mubr.f32.gmra.mrb[0].mxu0 %v899
    %v967 = vpop.f32.mrb[0].mxu0
    %v968 = vadd.f32 0.0, %v967
    %v969 = vpop.f32.mrb[0].mxu0
    %970 = vdwg.mxu0
    %v971 = vmul.f32 %v330, %v968
    %972 = vset.pattern.permute.xlu0 3
    %973 = vperm.xlu0 %972, %v46
    %v974 = vpop.permute.xlu0 %973
    %v976 = vmul.f32 %v974, %v971
    %v977 = vadd.f32 %v816, %v976
    %v978 = vmul.f32 %v974, %v968
    %v979 = vadd.f32 %v818, %v978
    %981 = vrot.lane.b32.xlu0 %v649, 4
    %v982 = vpop.permute.xlu0 %981
    %985 = vrot.lane.b32.xlu0 %v810, 8
    %v986 = vpop.permute.xlu0 %985
    %989 = vrot.lane.b32.xlu0 %v971, 12
    %v990 = vpop.permute.xlu0 %989
    %v992 = vsel %vm75, %v487, %v982
    %vm993 = vcmask 64512
    %v994 = vsel %vm993, %v992, %v986
    %vm995 = vcmask 97280
    %v996 = vsel %vm995, %v994, %v990
    %998 = vrot.lane.b32.xlu0 %v484, 124
    %v999 = vpop.permute.xlu0 %998
    %1002 = vrot.lane.b32.xlu0 %v646, 2
    %v1003 = vpop.permute.xlu0 %1002
    %1006 = vrot.lane.b32.xlu0 %v807, 8
    %v1007 = vpop.permute.xlu0 %1006
    %1010 = vrot.lane.b32.xlu0 %v968, 14
    %v1011 = vpop.permute.xlu0 %1010
    %vm1013 = vcmask 48128
    %v1014 = vsel %vm1013, %v999, %v1003
    %v1015 = vsel %vm995, %v1014, %v1007
    %vm1016 = vcmask 146432
    %v1017 = vsel %vm1016, %v1015, %v1011
    %v1018 = vsel %vm75, %v46, 0
    %v1021 = vsel %vm79, %v64, 0
    %1023 = vmatprep.subr.mxu0 0.0
    %1024 = vmatpush1.msra.mxu0 %v1021
    %1025 = vmatprep.subr.mxu0 0.0
    %1026 = vmatpush1.msra.mxu0 0.0
    %1027 = vmatprep.subr.mxu0 0.0
    %1028 = vmatpush1.msra.mxu0 0.0
    %1029 = vmatprep.subr.mxu0 0.0
    %1030 = vmatpush1.msra.mxu0 0.0
    %1031 = vmatprep.subr.mxu0 0.0
    %1032 = vmatpush1.msra.mxu0 0.0
    %1033 = vmatprep.subr.mxu0 0.0
    %1034 = vmatpush1.msra.mxu0 0.0
    %1035 = vmatprep.subr.mxu0 0.0
    %1036 = vmatpush1.msra.mxu0 0.0
    %1037 = vmatprep.subr.mxu0 0.0
    %1038 = vmatpush1.msra.mxu0 0.0
    %1039 = vmatprep.subr.mxu0 0.0
    %1040 = vmatpush1.msra.mxu0 0.0
    %1041 = vmatprep.subr.mxu0 0.0
    %1042 = vmatpush1.msra.mxu0 0.0
    %1043 = vmatprep.subr.mxu0 0.0
    %1044 = vmatpush1.msra.mxu0 0.0
    %1045 = vmatprep.subr.mxu0 0.0
    %1046 = vmatpush1.msra.mxu0 0.0
    %1047 = vmatprep.subr.mxu0 0.0
    %1048 = vmatpush1.msra.mxu0 0.0
    %1049 = vmatprep.subr.mxu0 0.0
    %1050 = vmatpush1.msra.mxu0 0.0
    %1051 = vmatprep.subr.mxu0 0.0
    %1052 = vmatpush1.msra.mxu0 0.0
    %1053 = vmatprep.subr.mxu0 0.0
    %1054 = vmatpush1.msra.mxu0 0.0
    %1055 = vmatprep.subr.mxu0 0.0
    %1056 = vmatpush1.msra.mxu0 0.0
    %1057 = vmatprep.subr.mxu0 0.0
    %1058 = vmatpush1.msra.mxu0 0.0
    %1059 = vmatprep.subr.mxu0 0.0
    %1060 = vmatpush1.msra.mxu0 0.0
    %1061 = vmatprep.subr.mxu0 0.0
    %1062 = vmatpush1.msra.mxu0 0.0
    %1063 = vmatprep.subr.mxu0 0.0
    %1064 = vmatpush1.msra.mxu0 0.0
    %1065 = vmatprep.subr.mxu0 0.0
    %1066 = vmatpush1.msra.mxu0 0.0
    %1067 = vmatprep.subr.mxu0 0.0
    %1068 = vmatpush1.msra.mxu0 0.0
    %1069 = vmatprep.subr.mxu0 0.0
    %1070 = vmatpush1.msra.mxu0 0.0
    %1071 = vmatprep.subr.mxu0 0.0
    %1072 = vmatpush1.msra.mxu0 0.0
    %1073 = vmatprep.subr.mxu0 0.0
    %1074 = vmatpush1.msra.mxu0 0.0
    %1075 = vmatprep.subr.mxu0 0.0
    %1076 = vmatpush1.msra.mxu0 0.0
    %1077 = vmatprep.subr.mxu0 0.0
    %1078 = vmatpush1.msra.mxu0 0.0
    %1079 = vmatprep.subr.mxu0 0.0
    %1080 = vmatpush1.msra.mxu0 0.0
    %1081 = vmatprep.subr.mxu0 0.0
    %1082 = vmatpush1.msra.mxu0 0.0
    %1083 = vmatprep.subr.mxu0 0.0
    %1084 = vmatpush1.msra.mxu0 0.0
    %1085 = vmatprep.subr.mxu0 0.0
    %1086 = vmatpush1.msra.mxu0 0.0
    %1087 = vmatprep.mubr.f32.mxu0 0.0
    %1088 = vmatmul.mubr.f32.gmra.mrb[0].mxu0 %v1018
    %v1089 = vpop.f32.mrb[0].mxu0
    %v1090 = vadd.f32 0.0, %v1089
    %v1091 = vpop.f32.mrb[0].mxu0
    %1092 = vdwg.mxu0
    %v1094 = vsel %vm75, %v47, 0
    %1096 = vmatprep.subr.mxu0 0.0
    %1097 = vmatpush1.msra.mxu0 %v1021
    %1098 = vmatprep.subr.mxu0 0.0
    %1099 = vmatpush1.msra.mxu0 0.0
    %1100 = vmatprep.subr.mxu0 0.0
    %1101 = vmatpush1.msra.mxu0 0.0
    %1102 = vmatprep.subr.mxu0 0.0
    %1103 = vmatpush1.msra.mxu0 0.0
    %1104 = vmatprep.subr.mxu0 0.0
    %1105 = vmatpush1.msra.mxu0 0.0
    %1106 = vmatprep.subr.mxu0 0.0
    %1107 = vmatpush1.msra.mxu0 0.0
    %1108 = vmatprep.subr.mxu0 0.0
    %1109 = vmatpush1.msra.mxu0 0.0
    %1110 = vmatprep.subr.mxu0 0.0
    %1111 = vmatpush1.msra.mxu0 0.0
    %1112 = vmatprep.subr.mxu0 0.0
    %1113 = vmatpush1.msra.mxu0 0.0
    %1114 = vmatprep.subr.mxu0 0.0
    %1115 = vmatpush1.msra.mxu0 0.0
    %1116 = vmatprep.subr.mxu0 0.0
    %1117 = vmatpush1.msra.mxu0 0.0
    %1118 = vmatprep.subr.mxu0 0.0
    %1119 = vmatpush1.msra.mxu0 0.0
    %1120 = vmatprep.subr.mxu0 0.0
    %1121 = vmatpush1.msra.mxu0 0.0
    %1122 = vmatprep.subr.mxu0 0.0
    %1123 = vmatpush1.msra.mxu0 0.0
    %1124 = vmatprep.subr.mxu0 0.0
    %1125 = vmatpush1.msra.mxu0 0.0
    %1126 = vmatprep.subr.mxu0 0.0
    %1127 = vmatpush1.msra.mxu0 0.0
    %1128 = vmatprep.subr.mxu0 0.0
    %1129 = vmatpush1.msra.mxu0 0.0
    %1130 = vmatprep.subr.mxu0 0.0
    %1131 = vmatpush1.msra.mxu0 0.0
    %1132 = vmatprep.subr.mxu0 0.0
    %1133 = vmatpush1.msra.mxu0 0.0
    %1134 = vmatprep.subr.mxu0 0.0
    %1135 = vmatpush1.msra.mxu0 0.0
    %1136 = vmatprep.subr.mxu0 0.0
    %1137 = vmatpush1.msra.mxu0 0.0
    %1138 = vmatprep.subr.mxu0 0.0
    %1139 = vmatpush1.msra.mxu0 0.0
    %1140 = vmatprep.subr.mxu0 0.0
    %1141 = vmatpush1.msra.mxu0 0.0
    %1142 = vmatprep.subr.mxu0 0.0
    %1143 = vmatpush1.msra.mxu0 0.0
    %1144 = vmatprep.subr.mxu0 0.0
    %1145 = vmatpush1.msra.mxu0 0.0
    %1146 = vmatprep.subr.mxu0 0.0
    %1147 = vmatpush1.msra.mxu0 0.0
    %1148 = vmatprep.subr.mxu0 0.0
    %1149 = vmatpush1.msra.mxu0 0.0
    %1150 = vmatprep.subr.mxu0 0.0
    %1151 = vmatpush1.msra.mxu0 0.0
    %1152 = vmatprep.subr.mxu0 0.0
    %1153 = vmatpush1.msra.mxu0 0.0
    %1154 = vmatprep.subr.mxu0 0.0
    %1155 = vmatpush1.msra.mxu0 0.0
    %1156 = vmatprep.subr.mxu0 0.0
    %1157 = vmatpush1.msra.mxu0 0.0
    %1158 = vmatprep.subr.mxu0 0.0
    %1159 = vmatpush1.msra.mxu0 0.0
    %1160 = vmatprep.mubr.f32.mxu0 0.0
    %1161 = vmatmul.mubr.f32.gmra.mrb[0].mxu0 %v1094
    %v1162 = vpop.f32.mrb[0].mxu0
    %v1163 = vadd.f32 0.0, %v1162
    %v1164 = vpop.f32.mrb[0].mxu0
    %1165 = vdwg.mxu0
    %v1166 = vmul.f32 %v326, %v46
    %1168 = vrot.lane.b32.xlu0 %v1090, 8
    %v1169 = vpop.permute.xlu0 %1168
    %v1171 = vmul.f32 %v315, %v1169
    %1173 = vrot.lane.b32.xlu0 %v1171, 120
    %v1174 = vpop.permute.xlu0 %1173
    %v1175 = vsel %vm1013, %v1174, 0
    %v1178 = vsel %vm1013, %v65, 0
    %1180 = vmatprep.subr.mxu0 0.0
    %1181 = vmatpush1.xpose.msra.mxu0 %v1178
    %1182 = vmatprep.subr.mxu0 0.0
    %1183 = vmatpush1.xpose.msra.mxu0 0.0
    %1184 = vmatprep.subr.mxu0 0.0
    %1185 = vmatpush1.xpose.msra.mxu0 0.0
    %1186 = vmatprep.subr.mxu0 0.0
    %1187 = vmatpush1.xpose.msra.mxu0 0.0
    %1188 = vmatprep.subr.mxu0 0.0
    %1189 = vmatpush1.xpose.msra.mxu0 0.0
    %1190 = vmatprep.subr.mxu0 0.0
    %1191 = vmatpush1.xpose.msra.mxu0 0.0
    %1192 = vmatprep.subr.mxu0 0.0
    %1193 = vmatpush1.xpose.msra.mxu0 0.0
    %1194 = vmatprep.subr.mxu0 0.0
    %1195 = vmatpush1.xpose.msra.mxu0 0.0
    %1196 = vmatprep.subr.mxu0 0.0
    %1197 = vmatpush1.xpose.msra.mxu0 0.0
    %1198 = vmatprep.subr.mxu0 0.0
    %1199 = vmatpush1.xpose.msra.mxu0 0.0
    %1200 = vmatprep.subr.mxu0 0.0
    %1201 = vmatpush1.xpose.msra.mxu0 0.0
    %1202 = vmatprep.subr.mxu0 0.0
    %1203 = vmatpush1.xpose.msra.mxu0 0.0
    %1204 = vmatprep.subr.mxu0 0.0
    %1205 = vmatpush1.xpose.msra.mxu0 0.0
    %1206 = vmatprep.subr.mxu0 0.0
    %1207 = vmatpush1.xpose.msra.mxu0 0.0
    %1208 = vmatprep.subr.mxu0 0.0
    %1209 = vmatpush1.xpose.msra.mxu0 0.0
    %1210 = vmatprep.subr.mxu0 0.0
    %1211 = vmatpush1.xpose.msra.mxu0 0.0
    %1212 = vmatprep.subr.mxu0 0.0
    %1213 = vmatpush1.xpose.msra.mxu0 0.0
    %1214 = vmatprep.subr.mxu0 0.0
    %1215 = vmatpush1.xpose.msra.mxu0 0.0
    %1216 = vmatprep.subr.mxu0 0.0
    %1217 = vmatpush1.xpose.msra.mxu0 0.0
    %1218 = vmatprep.subr.mxu0 0.0
    %1219 = vmatpush1.xpose.msra.mxu0 0.0
    %1220 = vmatprep.subr.mxu0 0.0
    %1221 = vmatpush1.xpose.msra.mxu0 0.0
    %1222 = vmatprep.subr.mxu0 0.0
    %1223 = vmatpush1.xpose.msra.mxu0 0.0
    %1224 = vmatprep.subr.mxu0 0.0
    %1225 = vmatpush1.xpose.msra.mxu0 0.0
    %1226 = vmatprep.subr.mxu0 0.0
    %1227 = vmatpush1.xpose.msra.mxu0 0.0
    %1228 = vmatprep.subr.mxu0 0.0
    %1229 = vmatpush1.xpose.msra.mxu0 0.0
    %1230 = vmatprep.subr.mxu0 0.0
    %1231 = vmatpush1.xpose.msra.mxu0 0.0
    %1232 = vmatprep.subr.mxu0 0.0
    %1233 = vmatpush1.xpose.msra.mxu0 0.0
    %1234 = vmatprep.subr.mxu0 0.0
    %1235 = vmatpush1.xpose.msra.mxu0 0.0
    %1236 = vmatprep.subr.mxu0 0.0
    %1237 = vmatpush1.xpose.msra.mxu0 0.0
    %1238 = vmatprep.subr.mxu0 0.0
    %1239 = vmatpush1.xpose.msra.mxu0 0.0
    %1240 = vmatprep.subr.mxu0 0.0
    %1241 = vmatpush1.xpose.msra.mxu0 0.0
    %1242 = vmatprep.subr.mxu0 0.0
    %1243 = vmatpush1.xpose.msra.mxu0 0.0
    %1244 = vmatprep.mubr.f32.mxu0 0.0
    %1245 = vmatmul.mubr.f32.gmra.mrb[0].mxu0 %v1175
    %v1246 = vpop.f32.mrb[0].mxu0
    %v1247 = vadd.f32 0.0, %v1246
    %v1248 = vpop.f32.mrb[0].mxu0
    %1249 = vdwg.mxu0
    %v1250 = vadd.f32 %v1166, %v1247
    %v1251 = vmul.f32 %v326, %v47
    %1253 = vrot.lane.b32.xlu0 %v1163, 8
    %v1254 = vpop.permute.xlu0 %1253
    %v1256 = vmul.f32 %v315, %v1254
    %1258 = vrot.lane.b32.xlu0 %v1256, 120
    %v1259 = vpop.permute.xlu0 %1258
    %v1260 = vsel %vm1013, %v1259, 0
    %1262 = vmatprep.subr.mxu0 0.0
    %1263 = vmatpush1.xpose.msra.mxu0 %v1178
    %1264 = vmatprep.subr.mxu0 0.0
    %1265 = vmatpush1.xpose.msra.mxu0 0.0
    %1266 = vmatprep.subr.mxu0 0.0
    %1267 = vmatpush1.xpose.msra.mxu0 0.0
    %1268 = vmatprep.subr.mxu0 0.0
    %1269 = vmatpush1.xpose.msra.mxu0 0.0
    %1270 = vmatprep.subr.mxu0 0.0
    %1271 = vmatpush1.xpose.msra.mxu0 0.0
    %1272 = vmatprep.subr.mxu0 0.0
    %1273 = vmatpush1.xpose.msra.mxu0 0.0
    %1274 = vmatprep.subr.mxu0 0.0
    %1275 = vmatpush1.xpose.msra.mxu0 0.0
    %1276 = vmatprep.subr.mxu0 0.0
    %1277 = vmatpush1.xpose.msra.mxu0 0.0
    %1278 = vmatprep.subr.mxu0 0.0
    %1279 = vmatpush1.xpose.msra.mxu0 0.0
    %1280 = vmatprep.subr.mxu0 0.0
    %1281 = vmatpush1.xpose.msra.mxu0 0.0
    %1282 = vmatprep.subr.mxu0 0.0
    %1283 = vmatpush1.xpose.msra.mxu0 0.0
    %1284 = vmatprep.subr.mxu0 0.0
    %1285 = vmatpush1.xpose.msra.mxu0 0.0
    %1286 = vmatprep.subr.mxu0 0.0
    %1287 = vmatpush1.xpose.msra.mxu0 0.0
    %1288 = vmatprep.subr.mxu0 0.0
    %1289 = vmatpush1.xpose.msra.mxu0 0.0
    %1290 = vmatprep.subr.mxu0 0.0
    %1291 = vmatpush1.xpose.msra.mxu0 0.0
    %1292 = vmatprep.subr.mxu0 0.0
    %1293 = vmatpush1.xpose.msra.mxu0 0.0
    %1294 = vmatprep.subr.mxu0 0.0
    %1295 = vmatpush1.xpose.msra.mxu0 0.0
    %1296 = vmatprep.subr.mxu0 0.0
    %1297 = vmatpush1.xpose.msra.mxu0 0.0
    %1298 = vmatprep.subr.mxu0 0.0
    %1299 = vmatpush1.xpose.msra.mxu0 0.0
    %1300 = vmatprep.subr.mxu0 0.0
    %1301 = vmatpush1.xpose.msra.mxu0 0.0
    %1302 = vmatprep.subr.mxu0 0.0
    %1303 = vmatpush1.xpose.msra.mxu0 0.0
    %1304 = vmatprep.subr.mxu0 0.0
    %1305 = vmatpush1.xpose.msra.mxu0 0.0
    %1306 = vmatprep.subr.mxu0 0.0
    %1307 = vmatpush1.xpose.msra.mxu0 0.0
    %1308 = vmatprep.subr.mxu0 0.0
    %1309 = vmatpush1.xpose.msra.mxu0 0.0
    %1310 = vmatprep.subr.mxu0 0.0
    %1311 = vmatpush1.xpose.msra.mxu0 0.0
    %1312 = vmatprep.subr.mxu0 0.0
    %1313 = vmatpush1.xpose.msra.mxu0 0.0
    %1314 = vmatprep.subr.mxu0 0.0
    %1315 = vmatpush1.xpose.msra.mxu0 0.0
    %1316 = vmatprep.subr.mxu0 0.0
    %1317 = vmatpush1.xpose.msra.mxu0 0.0
    %1318 = vmatprep.subr.mxu0 0.0
    %1319 = vmatpush1.xpose.msra.mxu0 0.0
    %1320 = vmatprep.subr.mxu0 0.0
    %1321 = vmatpush1.xpose.msra.mxu0 0.0
    %1322 = vmatprep.subr.mxu0 0.0
    %1323 = vmatpush1.xpose.msra.mxu0 0.0
    %1324 = vmatprep.subr.mxu0 0.0
    %1325 = vmatpush1.xpose.msra.mxu0 0.0
    %1326 = vmatprep.mubr.f32.mxu0 0.0
    %1327 = vmatmul.mubr.f32.gmra.mrb[0].mxu0 %v1260
    %v1328 = vpop.f32.mrb[0].mxu0
    %v1329 = vadd.f32 0.0, %v1328
    %v1330 = vpop.f32.mrb[0].mxu0
    %1331 = vdwg.mxu0
    %v1332 = vadd.f32 %v1251, %v1329
    %v1333 = vmul.f32 %v977, %v46
    %1334 = vrot.lane.b32.xlu0 %v1090, 4
    %v1335 = vpop.permute.xlu0 %1334
    %v1337 = vmul.f32 %v979, %v1335
    %1339 = vrot.lane.b32.xlu0 %v1337, 124
    %v1340 = vpop.permute.xlu0 %1339
    %v1341 = vsel %vm1013, %v1340, 0
    %1343 = vmatprep.subr.mxu0 0.0
    %1344 = vmatpush1.xpose.msra.mxu0 %v1178
    %1345 = vmatprep.subr.mxu0 0.0
    %1346 = vmatpush1.xpose.msra.mxu0 0.0
    %1347 = vmatprep.subr.mxu0 0.0
    %1348 = vmatpush1.xpose.msra.mxu0 0.0
    %1349 = vmatprep.subr.mxu0 0.0
    %1350 = vmatpush1.xpose.msra.mxu0 0.0
    %1351 = vmatprep.subr.mxu0 0.0
    %1352 = vmatpush1.xpose.msra.mxu0 0.0
    %1353 = vmatprep.subr.mxu0 0.0
    %1354 = vmatpush1.xpose.msra.mxu0 0.0
    %1355 = vmatprep.subr.mxu0 0.0
    %1356 = vmatpush1.xpose.msra.mxu0 0.0
    %1357 = vmatprep.subr.mxu0 0.0
    %1358 = vmatpush1.xpose.msra.mxu0 0.0
    %1359 = vmatprep.subr.mxu0 0.0
    %1360 = vmatpush1.xpose.msra.mxu0 0.0
    %1361 = vmatprep.subr.mxu0 0.0
    %1362 = vmatpush1.xpose.msra.mxu0 0.0
    %1363 = vmatprep.subr.mxu0 0.0
    %1364 = vmatpush1.xpose.msra.mxu0 0.0
    %1365 = vmatprep.subr.mxu0 0.0
    %1366 = vmatpush1.xpose.msra.mxu0 0.0
    %1367 = vmatprep.subr.mxu0 0.0
    %1368 = vmatpush1.xpose.msra.mxu0 0.0
    %1369 = vmatprep.subr.mxu0 0.0
    %1370 = vmatpush1.xpose.msra.mxu0 0.0
    %1371 = vmatprep.subr.mxu0 0.0
    %1372 = vmatpush1.xpose.msra.mxu0 0.0
    %1373 = vmatprep.subr.mxu0 0.0
    %1374 = vmatpush1.xpose.msra.mxu0 0.0
    %1375 = vmatprep.subr.mxu0 0.0
    %1376 = vmatpush1.xpose.msra.mxu0 0.0
    %1377 = vmatprep.subr.mxu0 0.0
    %1378 = vmatpush1.xpose.msra.mxu0 0.0
    %1379 = vmatprep.subr.mxu0 0.0
    %1380 = vmatpush1.xpose.msra.mxu0 0.0
    %1381 = vmatprep.subr.mxu0 0.0
    %1382 = vmatpush1.xpose.msra.mxu0 0.0
    %1383 = vmatprep.subr.mxu0 0.0
    %1384 = vmatpush1.xpose.msra.mxu0 0.0
    %1385 = vmatprep.subr.mxu0 0.0
    %1386 = vmatpush1.xpose.msra.mxu0 0.0
    %1387 = vmatprep.subr.mxu0 0.0
    %1388 = vmatpush1.xpose.msra.mxu0 0.0
    %1389 = vmatprep.subr.mxu0 0.0
    %1390 = vmatpush1.xpose.msra.mxu0 0.0
    %1391 = vmatprep.subr.mxu0 0.0
    %1392 = vmatpush1.xpose.msra.mxu0 0.0
    %1393 = vmatprep.subr.mxu0 0.0
    %1394 = vmatpush1.xpose.msra.mxu0 0.0
    %1395 = vmatprep.subr.mxu0 0.0
    %1396 = vmatpush1.xpose.msra.mxu0 0.0
    %1397 = vmatprep.subr.mxu0 0.0
    %1398 = vmatpush1.xpose.msra.mxu0 0.0
    %1399 = vmatprep.subr.mxu0 0.0
    %1400 = vmatpush1.xpose.msra.mxu0 0.0
    %1401 = vmatprep.subr.mxu0 0.0
    %1402 = vmatpush1.xpose.msra.mxu0 0.0
    %1403 = vmatprep.subr.mxu0 0.0
    %1404 = vmatpush1.xpose.msra.mxu0 0.0
    %1405 = vmatprep.subr.mxu0 0.0
    %1406 = vmatpush1.xpose.msra.mxu0 0.0
    %1407 = vmatprep.mubr.f32.mxu0 0.0
    %1408 = vmatmul.mubr.f32.gmra.mrb[0].mxu0 %v1341
    %v1409 = vpop.f32.mrb[0].mxu0
    %v1410 = vadd.f32 0.0, %v1409
    %v1411 = vpop.f32.mrb[0].mxu0
    %1412 = vdwg.mxu0
    %v1413 = vadd.f32 %v1333, %v1410
    %v1415 = vsel %vm75, %v1332, 0
    %v1417 = vsel %vm79, %v65, 0
    %1419 = vmatprep.subr.mxu0 0.0
    %1420 = vmatpush1.msra.mxu0 %v1417
    %1421 = vmatprep.subr.mxu0 0.0
    %1422 = vmatpush1.msra.mxu0 0.0
    %1423 = vmatprep.subr.mxu0 0.0
    %1424 = vmatpush1.msra.mxu0 0.0
    %1425 = vmatprep.subr.mxu0 0.0
    %1426 = vmatpush1.msra.mxu0 0.0
    %1427 = vmatprep.subr.mxu0 0.0
    %1428 = vmatpush1.msra.mxu0 0.0
    %1429 = vmatprep.subr.mxu0 0.0
    %1430 = vmatpush1.msra.mxu0 0.0
    %1431 = vmatprep.subr.mxu0 0.0
    %1432 = vmatpush1.msra.mxu0 0.0
    %1433 = vmatprep.subr.mxu0 0.0
    %1434 = vmatpush1.msra.mxu0 0.0
    %1435 = vmatprep.subr.mxu0 0.0
    %1436 = vmatpush1.msra.mxu0 0.0
    %1437 = vmatprep.subr.mxu0 0.0
    %1438 = vmatpush1.msra.mxu0 0.0
    %1439 = vmatprep.subr.mxu0 0.0
    %1440 = vmatpush1.msra.mxu0 0.0
    %1441 = vmatprep.subr.mxu0 0.0
    %1442 = vmatpush1.msra.mxu0 0.0
    %1443 = vmatprep.subr.mxu0 0.0
    %1444 = vmatpush1.msra.mxu0 0.0
    %1445 = vmatprep.subr.mxu0 0.0
    %1446 = vmatpush1.msra.mxu0 0.0
    %1447 = vmatprep.subr.mxu0 0.0
    %1448 = vmatpush1.msra.mxu0 0.0
    %1449 = vmatprep.subr.mxu0 0.0
    %1450 = vmatpush1.msra.mxu0 0.0
    %1451 = vmatprep.subr.mxu0 0.0
    %1452 = vmatpush1.msra.mxu0 0.0
    %1453 = vmatprep.subr.mxu0 0.0
    %1454 = vmatpush1.msra.mxu0 0.0
    %1455 = vmatprep.subr.mxu0 0.0
    %1456 = vmatpush1.msra.mxu0 0.0
    %1457 = vmatprep.subr.mxu0 0.0
    %1458 = vmatpush1.msra.mxu0 0.0
    %1459 = vmatprep.subr.mxu0 0.0
    %1460 = vmatpush1.msra.mxu0 0.0
    %1461 = vmatprep.subr.mxu0 0.0
    %1462 = vmatpush1.msra.mxu0 0.0
    %1463 = vmatprep.subr.mxu0 0.0
    %1464 = vmatpush1.msra.mxu0 0.0
    %1465 = vmatprep.subr.mxu0 0.0
    %1466 = vmatpush1.msra.mxu0 0.0
    %1467 = vmatprep.subr.mxu0 0.0
    %1468 = vmatpush1.msra.mxu0 0.0
    %1469 = vmatprep.subr.mxu0 0.0
    %1470 = vmatpush1.msra.mxu0 0.0
    %1471 = vmatprep.subr.mxu0 0.0
    %1472 = vmatpush1.msra.mxu0 0.0
    %1473 = vmatprep.subr.mxu0 0.0
    %1474 = vmatpush1.msra.mxu0 0.0
    %1475 = vmatprep.subr.mxu0 0.0
    %1476 = vmatpush1.msra.mxu0 0.0
    %1477 = vmatprep.subr.mxu0 0.0
    %1478 = vmatpush1.msra.mxu0 0.0
    %1479 = vmatprep.subr.mxu0 0.0
    %1480 = vmatpush1.msra.mxu0 0.0
    %1481 = vmatprep.subr.mxu0 0.0
    %1482 = vmatpush1.msra.mxu0 0.0
    %1483 = vmatprep.mubr.f32.mxu0 0.0
    %1484 = vmatmul.mubr.f32.gmra.mrb[0].mxu0 %v1415
    %v1485 = vpop.f32.mrb[0].mxu0
    %v1486 = vadd.f32 0.0, %v1485
    %v1487 = vpop.f32.mrb[0].mxu0
    %1488 = vdwg.mxu0
    %v1490 = vsel %vm75, %v1413, 0
    %1492 = vmatprep.subr.mxu0 0.0
    %1493 = vmatpush1.msra.mxu0 %v1417
    %1494 = vmatprep.subr.mxu0 0.0
    %1495 = vmatpush1.msra.mxu0 0.0
    %1496 = vmatprep.subr.mxu0 0.0
    %1497 = vmatpush1.msra.mxu0 0.0
    %1498 = vmatprep.subr.mxu0 0.0
    %1499 = vmatpush1.msra.mxu0 0.0
    %1500 = vmatprep.subr.mxu0 0.0
    %1501 = vmatpush1.msra.mxu0 0.0
    %1502 = vmatprep.subr.mxu0 0.0
    %1503 = vmatpush1.msra.mxu0 0.0
    %1504 = vmatprep.subr.mxu0 0.0
    %1505 = vmatpush1.msra.mxu0 0.0
    %1506 = vmatprep.subr.mxu0 0.0
    %1507 = vmatpush1.msra.mxu0 0.0
    %1508 = vmatprep.subr.mxu0 0.0
    %1509 = vmatpush1.msra.mxu0 0.0
    %1510 = vmatprep.subr.mxu0 0.0
    %1511 = vmatpush1.msra.mxu0 0.0
    %1512 = vmatprep.subr.mxu0 0.0
    %1513 = vmatpush1.msra.mxu0 0.0
    %1514 = vmatprep.subr.mxu0 0.0
    %1515 = vmatpush1.msra.mxu0 0.0
    %1516 = vmatprep.subr.mxu0 0.0
    %1517 = vmatpush1.msra.mxu0 0.0
    %1518 = vmatprep.subr.mxu0 0.0
    %1519 = vmatpush1.msra.mxu0 0.0
    %1520 = vmatprep.subr.mxu0 0.0
    %1521 = vmatpush1.msra.mxu0 0.0
    %1522 = vmatprep.subr.mxu0 0.0
    %1523 = vmatpush1.msra.mxu0 0.0
    %1524 = vmatprep.subr.mxu0 0.0
    %1525 = vmatpush1.msra.mxu0 0.0
    %1526 = vmatprep.subr.mxu0 0.0
    %1527 = vmatpush1.msra.mxu0 0.0
    %1528 = vmatprep.subr.mxu0 0.0
    %1529 = vmatpush1.msra.mxu0 0.0
    %1530 = vmatprep.subr.mxu0 0.0
    %1531 = vmatpush1.msra.mxu0 0.0
    %1532 = vmatprep.subr.mxu0 0.0
    %1533 = vmatpush1.msra.mxu0 0.0
    %1534 = vmatprep.subr.mxu0 0.0
    %1535 = vmatpush1.msra.mxu0 0.0
    %1536 = vmatprep.subr.mxu0 0.0
    %1537 = vmatpush1.msra.mxu0 0.0
    %1538 = vmatprep.subr.mxu0 0.0
    %1539 = vmatpush1.msra.mxu0 0.0
    %1540 = vmatprep.subr.mxu0 0.0
    %1541 = vmatpush1.msra.mxu0 0.0
    %1542 = vmatprep.subr.mxu0 0.0
    %1543 = vmatpush1.msra.mxu0 0.0
    %1544 = vmatprep.subr.mxu0 0.0
    %1545 = vmatpush1.msra.mxu0 0.0
    %1546 = vmatprep.subr.mxu0 0.0
    %1547 = vmatpush1.msra.mxu0 0.0
    %1548 = vmatprep.subr.mxu0 0.0
    %1549 = vmatpush1.msra.mxu0 0.0
    %1550 = vmatprep.subr.mxu0 0.0
    %1551 = vmatpush1.msra.mxu0 0.0
    %1552 = vmatprep.subr.mxu0 0.0
    %1553 = vmatpush1.msra.mxu0 0.0
    %1554 = vmatprep.subr.mxu0 0.0
    %1555 = vmatpush1.msra.mxu0 0.0
    %1556 = vmatprep.mubr.f32.mxu0 0.0
    %1557 = vmatmul.mubr.f32.gmra.mrb[0].mxu0 %v1490
    %v1558 = vpop.f32.mrb[0].mxu0
    %v1559 = vadd.f32 0.0, %v1558
    %v1560 = vpop.f32.mrb[0].mxu0
    %1561 = vdwg.mxu0
    %v1563 = vsel %vm75, %v1250, 0
    %1565 = vmatprep.subr.mxu0 0.0
    %1566 = vmatpush1.msra.mxu0 %v1417
    %1567 = vmatprep.subr.mxu0 0.0
    %1568 = vmatpush1.msra.mxu0 0.0
    %1569 = vmatprep.subr.mxu0 0.0
    %1570 = vmatpush1.msra.mxu0 0.0
    %1571 = vmatprep.subr.mxu0 0.0
    %1572 = vmatpush1.msra.mxu0 0.0
    %1573 = vmatprep.subr.mxu0 0.0
    %1574 = vmatpush1.msra.mxu0 0.0
    %1575 = vmatprep.subr.mxu0 0.0
    %1576 = vmatpush1.msra.mxu0 0.0
    %1577 = vmatprep.subr.mxu0 0.0
    %1578 = vmatpush1.msra.mxu0 0.0
    %1579 = vmatprep.subr.mxu0 0.0
    %1580 = vmatpush1.msra.mxu0 0.0
    %1581 = vmatprep.subr.mxu0 0.0
    %1582 = vmatpush1.msra.mxu0 0.0
    %1583 = vmatprep.subr.mxu0 0.0
    %1584 = vmatpush1.msra.mxu0 0.0
    %1585 = vmatprep.subr.mxu0 0.0
    %1586 = vmatpush1.msra.mxu0 0.0
    %1587 = vmatprep.subr.mxu0 0.0
    %1588 = vmatpush1.msra.mxu0 0.0
    %1589 = vmatprep.subr.mxu0 0.0
    %1590 = vmatpush1.msra.mxu0 0.0
    %1591 = vmatprep.subr.mxu0 0.0
    %1592 = vmatpush1.msra.mxu0 0.0
    %1593 = vmatprep.subr.mxu0 0.0
    %1594 = vmatpush1.msra.mxu0 0.0
    %1595 = vmatprep.subr.mxu0 0.0
    %1596 = vmatpush1.msra.mxu0 0.0
    %1597 = vmatprep.subr.mxu0 0.0
    %1598 = vmatpush1.msra.mxu0 0.0
    %1599 = vmatprep.subr.mxu0 0.0
    %1600 = vmatpush1.msra.mxu0 0.0
    %1601 = vmatprep.subr.mxu0 0.0
    %1602 = vmatpush1.msra.mxu0 0.0
    %1603 = vmatprep.subr.mxu0 0.0
    %1604 = vmatpush1.msra.mxu0 0.0
    %1605 = vmatprep.subr.mxu0 0.0
    %1606 = vmatpush1.msra.mxu0 0.0
    %1607 = vmatprep.subr.mxu0 0.0
    %1608 = vmatpush1.msra.mxu0 0.0
    %1609 = vmatprep.subr.mxu0 0.0
    %1610 = vmatpush1.msra.mxu0 0.0
    %1611 = vmatprep.subr.mxu0 0.0
    %1612 = vmatpush1.msra.mxu0 0.0
    %1613 = vmatprep.subr.mxu0 0.0
    %1614 = vmatpush1.msra.mxu0 0.0
    %1615 = vmatprep.subr.mxu0 0.0
    %1616 = vmatpush1.msra.mxu0 0.0
    %1617 = vmatprep.subr.mxu0 0.0
    %1618 = vmatpush1.msra.mxu0 0.0
    %1619 = vmatprep.subr.mxu0 0.0
    %1620 = vmatpush1.msra.mxu0 0.0
    %1621 = vmatprep.subr.mxu0 0.0
    %1622 = vmatpush1.msra.mxu0 0.0
    %1623 = vmatprep.subr.mxu0 0.0
    %1624 = vmatpush1.msra.mxu0 0.0
    %1625 = vmatprep.subr.mxu0 0.0
    %1626 = vmatpush1.msra.mxu0 0.0
    %1627 = vmatprep.subr.mxu0 0.0
    %1628 = vmatpush1.msra.mxu0 0.0
    %1629 = vmatprep.mubr.f32.mxu0 0.0
    %1630 = vmatmul.mubr.f32.gmra.mrb[0].mxu0 %v1563
    %v1631 = vpop.f32.mrb[0].mxu0
    %v1632 = vadd.f32 0.0, %v1631
    %v1633 = vpop.f32.mrb[0].mxu0
    %1634 = vdwg.mxu0
    %v1635 = vmul.f32 %v326, %v1332
    %1637 = vrot.lane.b32.xlu0 %v1486, 8
    %v1638 = vpop.permute.xlu0 %1637
    %v1640 = vmul.f32 %v315, %v1638
    %1642 = vrot.lane.b32.xlu0 %v1640, 120
    %v1643 = vpop.permute.xlu0 %1642
    %v1644 = vsel %vm1013, %v1643, 0
    %v1646 = vsel %vm1013, %v64, 0
    %1648 = vmatprep.subr.mxu0 0.0
    %1649 = vmatpush1.xpose.msra.mxu0 %v1646
    %1650 = vmatprep.subr.mxu0 0.0
    %1651 = vmatpush1.xpose.msra.mxu0 0.0
    %1652 = vmatprep.subr.mxu0 0.0
    %1653 = vmatpush1.xpose.msra.mxu0 0.0
    %1654 = vmatprep.subr.mxu0 0.0
    %1655 = vmatpush1.xpose.msra.mxu0 0.0
    %1656 = vmatprep.subr.mxu0 0.0
    %1657 = vmatpush1.xpose.msra.mxu0 0.0
    %1658 = vmatprep.subr.mxu0 0.0
    %1659 = vmatpush1.xpose.msra.mxu0 0.0
    %1660 = vmatprep.subr.mxu0 0.0
    %1661 = vmatpush1.xpose.msra.mxu0 0.0
    %1662 = vmatprep.subr.mxu0 0.0
    %1663 = vmatpush1.xpose.msra.mxu0 0.0
    %1664 = vmatprep.subr.mxu0 0.0
    %1665 = vmatpush1.xpose.msra.mxu0 0.0
    %1666 = vmatprep.subr.mxu0 0.0
    %1667 = vmatpush1.xpose.msra.mxu0 0.0
    %1668 = vmatprep.subr.mxu0 0.0
    %1669 = vmatpush1.xpose.msra.mxu0 0.0
    %1670 = vmatprep.subr.mxu0 0.0
    %1671 = vmatpush1.xpose.msra.mxu0 0.0
    %1672 = vmatprep.subr.mxu0 0.0
    %1673 = vmatpush1.xpose.msra.mxu0 0.0
    %1674 = vmatprep.subr.mxu0 0.0
    %1675 = vmatpush1.xpose.msra.mxu0 0.0
    %1676 = vmatprep.subr.mxu0 0.0
    %1677 = vmatpush1.xpose.msra.mxu0 0.0
    %1678 = vmatprep.subr.mxu0 0.0
    %1679 = vmatpush1.xpose.msra.mxu0 0.0
    %1680 = vmatprep.subr.mxu0 0.0
    %1681 = vmatpush1.xpose.msra.mxu0 0.0
    %1682 = vmatprep.subr.mxu0 0.0
    %1683 = vmatpush1.xpose.msra.mxu0 0.0
    %1684 = vmatprep.subr.mxu0 0.0
    %1685 = vmatpush1.xpose.msra.mxu0 0.0
    %1686 = vmatprep.subr.mxu0 0.0
    %1687 = vmatpush1.xpose.msra.mxu0 0.0
    %1688 = vmatprep.subr.mxu0 0.0
    %1689 = vmatpush1.xpose.msra.mxu0 0.0
    %1690 = vmatprep.subr.mxu0 0.0
    %1691 = vmatpush1.xpose.msra.mxu0 0.0
    %1692 = vmatprep.subr.mxu0 0.0
    %1693 = vmatpush1.xpose.msra.mxu0 0.0
    %1694 = vmatprep.subr.mxu0 0.0
    %1695 = vmatpush1.xpose.msra.mxu0 0.0
    %1696 = vmatprep.subr.mxu0 0.0
    %1697 = vmatpush1.xpose.msra.mxu0 0.0
    %1698 = vmatprep.subr.mxu0 0.0
    %1699 = vmatpush1.xpose.msra.mxu0 0.0
    %1700 = vmatprep.subr.mxu0 0.0
    %1701 = vmatpush1.xpose.msra.mxu0 0.0
    %1702 = vmatprep.subr.mxu0 0.0
    %1703 = vmatpush1.xpose.msra.mxu0 0.0
    %1704 = vmatprep.subr.mxu0 0.0
    %1705 = vmatpush1.xpose.msra.mxu0 0.0
    %1706 = vmatprep.subr.mxu0 0.0
    %1707 = vmatpush1.xpose.msra.mxu0 0.0
    %1708 = vmatprep.subr.mxu0 0.0
    %1709 = vmatpush1.xpose.msra.mxu0 0.0
    %1710 = vmatprep.subr.mxu0 0.0
    %1711 = vmatpush1.xpose.msra.mxu0 0.0
    %1712 = vmatprep.mubr.f32.mxu0 0.0
    %1713 = vmatmul.mubr.f32.gmra.mrb[0].mxu0 %v1644
    %v1714 = vpop.f32.mrb[0].mxu0
    %v1715 = vadd.f32 0.0, %v1714
    %v1716 = vpop.f32.mrb[0].mxu0
    %1717 = vdwg.mxu0
    %v1718 = vadd.f32 %v1635, %v1715
    %v1719 = vmul.f32 %v47, 1e-09
    %v1720 = vadd.f32 %v1718, %v1719
    %v1721 = vmul.f32 %v326, %v1413
    %1723 = vrot.lane.b32.xlu0 %v1559, 8
    %v1724 = vpop.permute.xlu0 %1723
    %v1726 = vmul.f32 %v315, %v1724
    %1728 = vrot.lane.b32.xlu0 %v1726, 120
    %v1729 = vpop.permute.xlu0 %1728
    %v1730 = vsel %vm1013, %v1729, 0
    %1732 = vmatprep.subr.mxu0 0.0
    %1733 = vmatpush1.xpose.msra.mxu0 %v1646
    %1734 = vmatprep.subr.mxu0 0.0
    %1735 = vmatpush1.xpose.msra.mxu0 0.0
    %1736 = vmatprep.subr.mxu0 0.0
    %1737 = vmatpush1.xpose.msra.mxu0 0.0
    %1738 = vmatprep.subr.mxu0 0.0
    %1739 = vmatpush1.xpose.msra.mxu0 0.0
    %1740 = vmatprep.subr.mxu0 0.0
    %1741 = vmatpush1.xpose.msra.mxu0 0.0
    %1742 = vmatprep.subr.mxu0 0.0
    %1743 = vmatpush1.xpose.msra.mxu0 0.0
    %1744 = vmatprep.subr.mxu0 0.0
    %1745 = vmatpush1.xpose.msra.mxu0 0.0
    %1746 = vmatprep.subr.mxu0 0.0
    %1747 = vmatpush1.xpose.msra.mxu0 0.0
    %1748 = vmatprep.subr.mxu0 0.0
    %1749 = vmatpush1.xpose.msra.mxu0 0.0
    %1750 = vmatprep.subr.mxu0 0.0
    %1751 = vmatpush1.xpose.msra.mxu0 0.0
    %1752 = vmatprep.subr.mxu0 0.0
    %1753 = vmatpush1.xpose.msra.mxu0 0.0
    %1754 = vmatprep.subr.mxu0 0.0
    %1755 = vmatpush1.xpose.msra.mxu0 0.0
    %1756 = vmatprep.subr.mxu0 0.0
    %1757 = vmatpush1.xpose.msra.mxu0 0.0
    %1758 = vmatprep.subr.mxu0 0.0
    %1759 = vmatpush1.xpose.msra.mxu0 0.0
    %1760 = vmatprep.subr.mxu0 0.0
    %1761 = vmatpush1.xpose.msra.mxu0 0.0
    %1762 = vmatprep.subr.mxu0 0.0
    %1763 = vmatpush1.xpose.msra.mxu0 0.0
    %1764 = vmatprep.subr.mxu0 0.0
    %1765 = vmatpush1.xpose.msra.mxu0 0.0
    %1766 = vmatprep.subr.mxu0 0.0
    %1767 = vmatpush1.xpose.msra.mxu0 0.0
    %1768 = vmatprep.subr.mxu0 0.0
    %1769 = vmatpush1.xpose.msra.mxu0 0.0
    %1770 = vmatprep.subr.mxu0 0.0
    %1771 = vmatpush1.xpose.msra.mxu0 0.0
    %1772 = vmatprep.subr.mxu0 0.0
    %1773 = vmatpush1.xpose.msra.mxu0 0.0
    %1774 = vmatprep.subr.mxu0 0.0
    %1775 = vmatpush1.xpose.msra.mxu0 0.0
    %1776 = vmatprep.subr.mxu0 0.0
    %1777 = vmatpush1.xpose.msra.mxu0 0.0
    %1778 = vmatprep.subr.mxu0 0.0
    %1779 = vmatpush1.xpose.msra.mxu0 0.0
    %1780 = vmatprep.subr.mxu0 0.0
    %1781 = vmatpush1.xpose.msra.mxu0 0.0
    %1782 = vmatprep.subr.mxu0 0.0
    %1783 = vmatpush1.xpose.msra.mxu0 0.0
    %1784 = vmatprep.subr.mxu0 0.0
    %1785 = vmatpush1.xpose.msra.mxu0 0.0
    %1786 = vmatprep.subr.mxu0 0.0
    %1787 = vmatpush1.xpose.msra.mxu0 0.0
    %1788 = vmatprep.subr.mxu0 0.0
    %1789 = vmatpush1.xpose.msra.mxu0 0.0
    %1790 = vmatprep.subr.mxu0 0.0
    %1791 = vmatpush1.xpose.msra.mxu0 0.0
    %1792 = vmatprep.subr.mxu0 0.0
    %1793 = vmatpush1.xpose.msra.mxu0 0.0
    %1794 = vmatprep.subr.mxu0 0.0
    %1795 = vmatpush1.xpose.msra.mxu0 0.0
    %1796 = vmatprep.mubr.f32.mxu0 0.0
    %1797 = vmatmul.mubr.f32.gmra.mrb[0].mxu0 %v1730
    %v1798 = vpop.f32.mrb[0].mxu0
    %v1799 = vadd.f32 0.0, %v1798
    %v1800 = vpop.f32.mrb[0].mxu0
    %1801 = vdwg.mxu0
    %v1802 = vadd.f32 %v1721, %v1799
    %v1803 = vmul.f32 %v977, %v1250
    %v1804 = vadd.f32 %v1802, %v1803
    %1806 = vrot.lane.b32.xlu0 %v1632, 4
    %v1807 = vpop.permute.xlu0 %1806
    %v1809 = vmul.f32 %v979, %v1807
    %1811 = vrot.lane.b32.xlu0 %v1809, 124
    %v1812 = vpop.permute.xlu0 %1811
    %v1813 = vsel %vm1013, %v1812, 0
    %1815 = vmatprep.subr.mxu0 0.0
    %1816 = vmatpush1.xpose.msra.mxu0 %v1646
    %1817 = vmatprep.subr.mxu0 0.0
    %1818 = vmatpush1.xpose.msra.mxu0 0.0
    %1819 = vmatprep.subr.mxu0 0.0
    %1820 = vmatpush1.xpose.msra.mxu0 0.0
    %1821 = vmatprep.subr.mxu0 0.0
    %1822 = vmatpush1.xpose.msra.mxu0 0.0
    %1823 = vmatprep.subr.mxu0 0.0
    %1824 = vmatpush1.xpose.msra.mxu0 0.0
    %1825 = vmatprep.subr.mxu0 0.0
    %1826 = vmatpush1.xpose.msra.mxu0 0.0
    %1827 = vmatprep.subr.mxu0 0.0
    %1828 = vmatpush1.xpose.msra.mxu0 0.0
    %1829 = vmatprep.subr.mxu0 0.0
    %1830 = vmatpush1.xpose.msra.mxu0 0.0
    %1831 = vmatprep.subr.mxu0 0.0
    %1832 = vmatpush1.xpose.msra.mxu0 0.0
    %1833 = vmatprep.subr.mxu0 0.0
    %1834 = vmatpush1.xpose.msra.mxu0 0.0
    %1835 = vmatprep.subr.mxu0 0.0
    %1836 = vmatpush1.xpose.msra.mxu0 0.0
    %1837 = vmatprep.subr.mxu0 0.0
    %1838 = vmatpush1.xpose.msra.mxu0 0.0
    %1839 = vmatprep.subr.mxu0 0.0
    %1840 = vmatpush1.xpose.msra.mxu0 0.0
    %1841 = vmatprep.subr.mxu0 0.0
    %1842 = vmatpush1.xpose.msra.mxu0 0.0
    %1843 = vmatprep.subr.mxu0 0.0
    %1844 = vmatpush1.xpose.msra.mxu0 0.0
    %1845 = vmatprep.subr.mxu0 0.0
    %1846 = vmatpush1.xpose.msra.mxu0 0.0
    %1847 = vmatprep.subr.mxu0 0.0
    %1848 = vmatpush1.xpose.msra.mxu0 0.0
    %1849 = vmatprep.subr.mxu0 0.0
    %1850 = vmatpush1.xpose.msra.mxu0 0.0
    %1851 = vmatprep.subr.mxu0 0.0
    %1852 = vmatpush1.xpose.msra.mxu0 0.0
    %1853 = vmatprep.subr.mxu0 0.0
    %1854 = vmatpush1.xpose.msra.mxu0 0.0
    %1855 = vmatprep.subr.mxu0 0.0
    %1856 = vmatpush1.xpose.msra.mxu0 0.0
    %1857 = vmatprep.subr.mxu0 0.0
    %1858 = vmatpush1.xpose.msra.mxu0 0.0
    %1859 = vmatprep.subr.mxu0 0.0
    %1860 = vmatpush1.xpose.msra.mxu0 0.0
    %1861 = vmatprep.subr.mxu0 0.0
    %1862 = vmatpush1.xpose.msra.mxu0 0.0
    %1863 = vmatprep.subr.mxu0 0.0
    %1864 = vmatpush1.xpose.msra.mxu0 0.0
    %1865 = vmatprep.subr.mxu0 0.0
    %1866 = vmatpush1.xpose.msra.mxu0 0.0
    %1867 = vmatprep.subr.mxu0 0.0
    %1868 = vmatpush1.xpose.msra.mxu0 0.0
    %1869 = vmatprep.subr.mxu0 0.0
    %1870 = vmatpush1.xpose.msra.mxu0 0.0
    %1871 = vmatprep.subr.mxu0 0.0
    %1872 = vmatpush1.xpose.msra.mxu0 0.0
    %1873 = vmatprep.subr.mxu0 0.0
    %1874 = vmatpush1.xpose.msra.mxu0 0.0
    %1875 = vmatprep.subr.mxu0 0.0
    %1876 = vmatpush1.xpose.msra.mxu0 0.0
    %1877 = vmatprep.subr.mxu0 0.0
    %1878 = vmatpush1.xpose.msra.mxu0 0.0
    %1879 = vmatprep.mubr.f32.mxu0 0.0
    %1880 = vmatmul.mubr.f32.gmra.mrb[0].mxu0 %v1813
    %v1881 = vpop.f32.mrb[0].mxu0
    %v1882 = vadd.f32 0.0, %v1881
    %v1883 = vpop.f32.mrb[0].mxu0
    %1884 = vdwg.mxu0
    %v1885 = vadd.f32 %v1804, %v1882
    %v1886 = vadd.f32 %v1720, %v1885
    %1888 = vrot.lane.b32.xlu0 %v315, 124
    %v1889 = vpop.permute.xlu0 %1888
    %v1891 = vadd.f32 %v1886, %v1889
    %v1892 = vmul.f32 %v46, %v1250
    %v1893 = vmul.f32 %v1090, %v1632
    %vm1894 = vcmask 195584
    %v1896 = vsel %vm1894, %v1017, 0
    %1898 = vmatprep.subr.mxu0 0.0
    %1899 = vmatpush1.msra.mxu0 %v66
    %1900 = vmatprep.subr.mxu0 0.0
    %1901 = vmatpush1.msra.mxu0 %v67
    %1902 = vmatprep.subr.mxu0 0.0
    %1903 = vmatpush1.msra.mxu0 %v68
    %1904 = vmatprep.subr.mxu0 0.0
    %1905 = vmatpush1.msra.mxu0 0.0
    %1906 = vmatprep.subr.mxu0 0.0
    %1907 = vmatpush1.msra.mxu0 0.0
    %1908 = vmatprep.subr.mxu0 0.0
    %1909 = vmatpush1.msra.mxu0 0.0
    %1910 = vmatprep.subr.mxu0 0.0
    %1911 = vmatpush1.msra.mxu0 0.0
    %1912 = vmatprep.subr.mxu0 0.0
    %1913 = vmatpush1.msra.mxu0 0.0
    %1914 = vmatprep.subr.mxu0 0.0
    %1915 = vmatpush1.msra.mxu0 0.0
    %1916 = vmatprep.subr.mxu0 0.0
    %1917 = vmatpush1.msra.mxu0 0.0
    %1918 = vmatprep.subr.mxu0 0.0
    %1919 = vmatpush1.msra.mxu0 0.0
    %1920 = vmatprep.subr.mxu0 0.0
    %1921 = vmatpush1.msra.mxu0 0.0
    %1922 = vmatprep.subr.mxu0 0.0
    %1923 = vmatpush1.msra.mxu0 0.0
    %1924 = vmatprep.subr.mxu0 0.0
    %1925 = vmatpush1.msra.mxu0 0.0
    %1926 = vmatprep.subr.mxu0 0.0
    %1927 = vmatpush1.msra.mxu0 0.0
    %1928 = vmatprep.subr.mxu0 0.0
    %1929 = vmatpush1.msra.mxu0 0.0
    %1930 = vmatprep.subr.mxu0 0.0
    %1931 = vmatpush1.msra.mxu0 0.0
    %1932 = vmatprep.subr.mxu0 0.0
    %1933 = vmatpush1.msra.mxu0 0.0
    %1934 = vmatprep.subr.mxu0 0.0
    %1935 = vmatpush1.msra.mxu0 0.0
    %1936 = vmatprep.subr.mxu0 0.0
    %1937 = vmatpush1.msra.mxu0 0.0
    %1938 = vmatprep.subr.mxu0 0.0
    %1939 = vmatpush1.msra.mxu0 0.0
    %1940 = vmatprep.subr.mxu0 0.0
    %1941 = vmatpush1.msra.mxu0 0.0
    %1942 = vmatprep.subr.mxu0 0.0
    %1943 = vmatpush1.msra.mxu0 0.0
    %1944 = vmatprep.subr.mxu0 0.0
    %1945 = vmatpush1.msra.mxu0 0.0
    %1946 = vmatprep.subr.mxu0 0.0
    %1947 = vmatpush1.msra.mxu0 0.0
    %1948 = vmatprep.subr.mxu0 0.0
    %1949 = vmatpush1.msra.mxu0 0.0
    %1950 = vmatprep.subr.mxu0 0.0
    %1951 = vmatpush1.msra.mxu0 0.0
    %1952 = vmatprep.subr.mxu0 0.0
    %1953 = vmatpush1.msra.mxu0 0.0
    %1954 = vmatprep.subr.mxu0 0.0
    %1955 = vmatpush1.msra.mxu0 0.0
    %1956 = vmatprep.subr.mxu0 0.0
    %1957 = vmatpush1.msra.mxu0 0.0
    %1958 = vmatprep.subr.mxu0 0.0
    %1959 = vmatpush1.msra.mxu0 0.0
    %1960 = vmatprep.subr.mxu0 0.0
    %1961 = vmatpush1.msra.mxu0 0.0
    %1962 = vmatprep.mubr.f32.mxu0 0.0
    %1963 = vmatmul.mubr.f32.gmra.mrb[0].mxu0 %v1896
    %v1964 = vpop.f32.mrb[0].mxu0
    %v1965 = vadd.f32 0.0, %v1964
    %v1966 = vpop.f32.mrb[0].mxu0
    %1967 = vdwg.mxu0
    %1969 = vrot.lane.b32.xlu0 %v1892, 4
    %v1970 = vpop.permute.xlu0 %1969
    %1973 = vrot.lane.b32.xlu0 %v1893, 8
    %v1974 = vpop.permute.xlu0 %1973
    %1977 = vrot.lane.b32.xlu0 %v996, 14
    %v1978 = vpop.permute.xlu0 %1977
    %1981 = vrot.lane.b32.xlu0 %v1965, 30
    %v1982 = vpop.permute.xlu0 %1981
    %v1984 = vsel %vm75, %v1891, %v1970
    %v1985 = vsel %vm993, %v1984, %v1974
    %vm1986 = vcmask 113664
    %v1987 = vsel %vm1986, %v1985, %v1978
    %vm1988 = vcmask 244736
    %v1989 = vsel %vm1988, %v1987, %v1982
    %vm1990 = vcmask 441344
    %v1991 = vsel %vm1990, %v1989, 0.0
    %1992 = vst [vmem:[#allocation2] sm:$0x3] %v1991
    // Predicated region
    $region54: #{tpu_custom_call.1} parent=1 // pred_check
      _
    $region55: #{tpu_custom_call.1} parent=1 // pred_check_branch
      %1994 = sbr.rel (0) target = $region57
    $region56: #{tpu_custom_call.1} parent=1 // pred_region
      %s1996 = ssub.s32 32, 32
      %1997 = vsyncadd [#allocation3], %s1996
      %s1999 = sshll.u32 [#allocation2], 4
      %s2000 = int_to_ptr.vmem [resolvable:$true] %s1999
      %2002 = dma.vmem_to_hbm [thread:$0]  %s2000, 32, %s13, [#allocation3]
    $region57: #{tpu_custom_call.1} parent=1 // pred_fallthru
      _
    // Predicated region
    $region58: #{tpu_custom_call.1} parent=1 // pred_check
      _
    $region59: #{tpu_custom_call.1} parent=1 // pred_check_branch
      %2004 = sbr.rel (0) target = $region61
    $region60: #{tpu_custom_call.1} parent=1 // pred_region
      %2005 = dma.done [#allocation3], 32
    $region61: #{tpu_custom_call.1} parent=1 // pred_fallthru
      _
    %2006 = vsyncpa [#allocation3], 1

</llo_original>
